<compile_context>
chip_gen: v6e
topology: v6e:2x2x1
jax: 0.10.0
libtpu: 0.0.40
codegen_flags: <defaults>
</compile_context>

<pallas_src>
import functools

import jax
import jax.numpy as jnp
from jax.experimental import pallas as pl
from jax.experimental.pallas import tpu as pltpu

NEG_INF = -1e30  # finite sentinel: avoids inf-inf -> NaN in the online updates


def _clip_loss_kernel(img_ref, txt_ref, out_ref,
                      row_m_ref, row_l_ref,
                      col_m_ref, col_l_ref,
                      acc_row_ref, acc_col_ref, acc_diag_ref,
                      *, n, t, nr, nc):
    i = pl.program_id(0)   # image (row) block
    j = pl.program_id(1)   # text (column) block, innermost / streamed

    # ---- init accumulators that persist across the whole grid -------------
    @pl.when(jnp.logical_and(i == 0, j == 0))
    def _():
        acc_row_ref[...] = jnp.zeros_like(acc_row_ref)
        acc_col_ref[...] = jnp.zeros_like(acc_col_ref)
        acc_diag_ref[...] = jnp.zeros_like(acc_diag_ref)

    # ---- per-row-block online-LSE state: reset at the first column block --
    @pl.when(j == 0)
    def _():
        row_m_ref[...] = jnp.full_like(row_m_ref, NEG_INF)
        row_l_ref[...] = jnp.zeros_like(row_l_ref)

    # ---- per-column-block online-LSE state: reset at the first row block --
    @pl.when(i == 0)
    def _():
        col_m_ref[j] = jnp.full((8, t), NEG_INF, jnp.float32)
        col_l_ref[j] = jnp.zeros((8, t), jnp.float32)

    img = img_ref[...]   # (t, d), native dtype (bf16 goes straight to the MXU)
    txt = txt_ref[...]   # (t, d)

    # logits tile = img @ txt.T without an explicit transpose (MXU consumes
    # the contracted operand natively).  f32 accumulation.
    s = jax.lax.dot_general(
        img, txt,
        dimension_numbers=(((1,), (1,)), ((), ())),
        preferred_element_type=jnp.float32,
    )  # (t, t) f32

    # Validity masks for padded rows / columns.
    row_idx = i * t + jax.lax.broadcasted_iota(jnp.int32, (t, 1), 0)
    col_idx = j * t + jax.lax.broadcasted_iota(jnp.int32, (1, t), 1)
    row_valid = row_idx < n            # (t, 1)
    col_valid = col_idx < n            # (1, t)
    if n != nr * t:                    # static: only mask when padding exists
        s = jnp.where(jnp.logical_and(row_valid, col_valid), s, NEG_INF)

    # ---- image -> text loss: per-row online logsumexp ----------------------
    m_prev = row_m_ref[...]                                  # (t, 1)
    bm = jnp.max(s, axis=1, keepdims=True)                   # (t, 1)
    m_new = jnp.maximum(m_prev, bm)
    p = jnp.exp(s - m_new)                                   # (t, t)
    row_l_ref[...] = (jnp.exp(m_prev - m_new) * row_l_ref[...]
                      + jnp.sum(p, axis=1, keepdims=True))
    row_m_ref[...] = m_new

    # ---- text -> image loss: per-column online logsumexp -------------------
    # Keep (8, t) sublane partials; only elementwise VPU work in the hot loop,
    # the cross-sublane collapse happens once per column block at finalize.
    s3 = s.reshape(t // 8, 8, t)
    cm_block = jnp.max(s3, axis=0)                           # (8, t)
    cm_prev = col_m_ref[j]                                   # (8, t)
    cm_new = jnp.maximum(cm_prev, cm_block)
    q = jnp.exp(s3 - cm_new[None, :, :])                     # (t//8, 8, t)
    col_l_ref[j] = (jnp.exp(cm_prev - cm_new) * col_l_ref[j]
                    + jnp.sum(q, axis=0))
    col_m_ref[j] = cm_new

    # ---- diagonal logits straight from the inputs (text block aligned) -----
    @pl.when(j == i)
    def _():
        diag = jnp.sum(img.astype(jnp.float32) * txt.astype(jnp.float32),
                       axis=1, keepdims=True)                # (t, 1)
        acc_diag_ref[...] += jnp.where(row_valid, diag, 0.0)

    # ---- finalize row LSE for this row block at the last column block ------
    @pl.when(j == nc - 1)
    def _():
        lse_r = row_m_ref[...] + jnp.log(row_l_ref[...])     # (t, 1)
        acc_row_ref[...] += jnp.where(row_valid, lse_r, 0.0)

    # ---- finalize column LSE for this column block at the last row block ---
    @pl.when(i == nr - 1)
    def _():
        cm = col_m_ref[j]                                    # (8, t)
        cl = col_l_ref[j]
        m_col = jnp.max(cm, axis=0, keepdims=True)           # single sublane collapse
        l_col = jnp.sum(cl * jnp.exp(cm - m_col), axis=0, keepdims=True)
        lse_c = m_col + jnp.log(l_col)                       # (1, t)
        acc_col_ref[...] += jnp.where(col_valid, lse_c, 0.0)

    # ---- scalar result, written once at the very last grid step ------------
    @pl.when(jnp.logical_and(i == nr - 1, j == nc - 1))
    def _():
        total = (0.5 * (jnp.sum(acc_row_ref[...]) + jnp.sum(acc_col_ref[...]))
                 - jnp.sum(acc_diag_ref[...])) / n
        out_ref[...] = jnp.zeros((8, 128), jnp.float32) + total


def clip_loss(text_features, image_features, *, block=128):
    """0.5 * (CE(image@text.T, arange) + CE(text@image.T, arange))."""
    n, d = image_features.shape
    assert text_features.shape == (n, d)
    t = block
    assert t % 8 == 0
    n_pad = ((n + t - 1) // t) * t
    if n_pad != n:
        pad = ((0, n_pad - n), (0, 0))
        text_features = jnp.pad(text_features, pad)
        image_features = jnp.pad(image_features, pad)
    nr = nc = n_pad // t

    kernel = functools.partial(_clip_loss_kernel, n=n, t=t, nr=nr, nc=nc)
    itemsize = jnp.dtype(image_features.dtype).itemsize

    out = pl.pallas_call(
        kernel,
        out_shape=jax.ShapeDtypeStruct((8, 128), jnp.float32),
        grid_spec=pltpu.PrefetchScalarGridSpec(
            num_scalar_prefetch=0,
            grid=(nr, nc),
            in_specs=[
                pl.BlockSpec((t, d), lambda i, j: (i, 0)),   # image rows
                pl.BlockSpec((t, d), lambda i, j: (j, 0)),   # text cols (streamed)
            ],
            out_specs=pl.BlockSpec((8, 128), lambda i, j: (0, 0)),
            scratch_shapes=[
                pltpu.VMEM((t, 1), jnp.float32),        # row running max
                pltpu.VMEM((t, 1), jnp.float32),        # row running sum
                pltpu.VMEM((nc, 8, t), jnp.float32),    # col running max (sublane partials)
                pltpu.VMEM((nc, 8, t), jnp.float32),    # col running sum (sublane partials)
                pltpu.VMEM((t, 1), jnp.float32),        # accum: sum of row LSE
                pltpu.VMEM((1, t), jnp.float32),        # accum: sum of col LSE
                pltpu.VMEM((t, 1), jnp.float32),        # accum: sum of diagonal logits
            ],
        ),
        compiler_params=pltpu.CompilerParams(
            # Shared column/scalar accumulators across row blocks -> sequential.
            dimension_semantics=("arbitrary", "arbitrary"),
            vmem_limit_bytes=32 * 1024 * 1024,
        ),
        cost_estimate=pl.CostEstimate(
            flops=2 * n_pad * n_pad * d,
            transcendentals=2 * n_pad * n_pad,
            bytes_accessed=2 * n_pad * d * itemsize + 8 * 128 * 4,
        ),
    )(image_features, text_features)
    return out[0, 0]


def clip_loss_ref(text_features, image_features):
    # Pure-JAX reference matching the PyTorch module semantics.
    logits = image_features.astype(jnp.float32) @ text_features.astype(jnp.float32).T
    n = logits.shape[0]
    labels = jnp.arange(n)
    log_p_img = logits - jax.scipy.special.logsumexp(logits, axis=1, keepdims=True)
    log_p_txt = logits.T - jax.scipy.special.logsumexp(logits.T, axis=1, keepdims=True)
    loss_img = -jnp.mean(log_p_img[jnp.arange(n), labels])
    loss_txt = -jnp.mean(log_p_txt[jnp.arange(n), labels])
    return 0.5 * (loss_img + loss_txt)


if __name__ == "__main__":
    key = jax.random.PRNGKey(0)

    # Small case (single tile, exercises padding/masking of 8 valid rows).
    k1, k2 = jax.random.split(key)
    N, D = 8, 32
    text_features = jax.random.normal(k1, (N, D), dtype=jnp.float32)
    image_features = jax.random.normal(k2, (N, D), dtype=jnp.float32)
    loss = jax.block_until_ready(clip_loss(text_features, image_features))
    ref = jax.block_until_ready(clip_loss_ref(text_features, image_features))
    assert jnp.allclose(loss, ref, rtol=1e-4, atol=1e-4), (loss, ref)

    # Larger case (multi-block grid + padding): exercises the tiled online-LSE path.
    k3, k4 = jax.random.split(k1)
    N2, D2 = 272, 64
    tf2 = jax.random.normal(k3, (N2, D2), dtype=jnp.float32)
    if2 = jax.random.normal(k4, (N2, D2), dtype=jnp.float32)
    loss2 = jax.block_until_ready(clip_loss(tf2, if2))
    ref2 = jax.block_until_ready(clip_loss_ref(tf2, if2))
    assert jnp.allclose(loss2, ref2, rtol=1e-4, atol=1e-4), (loss2, ref2)

    print("KERNEL_OK")
</pallas_src>

<mosaic_0001>
module attributes {stable_mosaic.version = 11 : i64} {
  func.func @_clip_loss_kernel(%arg0: i32, %arg1: i32, %arg2: memref<128x32xf32, #tpu.memory_space<vmem>>, %arg3: memref<128x32xf32, #tpu.memory_space<vmem>>, %arg4: memref<8x128xf32, #tpu.memory_space<vmem>>, %arg5: memref<128x1xf32, #tpu.memory_space<vmem>>, %arg6: memref<128x1xf32, #tpu.memory_space<vmem>>, %arg7: memref<1x8x128xf32, #tpu.memory_space<vmem>>, %arg8: memref<1x8x128xf32, #tpu.memory_space<vmem>>, %arg9: memref<128x1xf32, #tpu.memory_space<vmem>>, %arg10: memref<1x128xf32, #tpu.memory_space<vmem>>, %arg11: memref<128x1xf32, #tpu.memory_space<vmem>>) attributes {dimension_semantics = [#tpu.dimension_semantics<arbitrary>, #tpu.dimension_semantics<arbitrary>], iteration_bounds = array<i64: 1, 1>, scalar_prefetch = 0 : i64, scratch_operands = 7 : i64, tpu.core_type = #tpu.core_type<tc>, window_params = [{transform_indices = @transform_0, window_bounds = array<i64: 128, 32>}, {transform_indices = @transform_1, window_bounds = array<i64: 128, 32>}, {pipeline_mode = #tpu.pipeline_mode<synchronous>, transform_indices = @transform_2, window_bounds = array<i64: 8, 128>}]} {
    %c0_i32 = arith.constant 0 : i32
    %0 = arith.cmpi eq, %arg0, %c0_i32 : i32
    %c0_i32_0 = arith.constant 0 : i32
    %1 = arith.cmpi eq, %arg1, %c0_i32_0 : i32
    %2 = arith.andi %0, %1 : i1
    %3 = arith.extui %2 : i1 to i32
    %c0_i32_1 = arith.constant 0 : i32
    %4 = arith.cmpi ne, %3, %c0_i32_1 : i32
    scf.if %4 {
      %cst_40 = arith.constant 0.000000e+00 : f32
      %87 = vector.broadcast %cst_40 : f32 to vector<128x1xf32>
      %c0_41 = arith.constant 0 : index
      %c0_42 = arith.constant 0 : index
      %88 = vector.load %arg9[%c0_41, %c0_42] : memref<128x1xf32, #tpu.memory_space<vmem>>, vector<128x1xf32>
      tpu.vector_store %arg9[%c0_41, %c0_42], %87 {strides = array<i32>} : memref<128x1xf32, #tpu.memory_space<vmem>>, vector<128x1xf32>,
      %cst_43 = arith.constant 0.000000e+00 : f32
      %89 = vector.broadcast %cst_43 : f32 to vector<1x128xf32>
      %c0_44 = arith.constant 0 : index
      %c0_45 = arith.constant 0 : index
      %90 = vector.load %arg10[%c0_44, %c0_45] : memref<1x128xf32, #tpu.memory_space<vmem>>, vector<1x128xf32>
      tpu.vector_store %arg10[%c0_44, %c0_45], %89 {strides = array<i32>} : memref<1x128xf32, #tpu.memory_space<vmem>>, vector<1x128xf32>,
      %cst_46 = arith.constant 0.000000e+00 : f32
      %91 = vector.broadcast %cst_46 : f32 to vector<128x1xf32>
      %c0_47 = arith.constant 0 : index
      %c0_48 = arith.constant 0 : index
      %92 = vector.load %arg11[%c0_47, %c0_48] : memref<128x1xf32, #tpu.memory_space<vmem>>, vector<128x1xf32>
      tpu.vector_store %arg11[%c0_47, %c0_48], %91 {strides = array<i32>} : memref<128x1xf32, #tpu.memory_space<vmem>>, vector<128x1xf32>,
    } else {
    }
    %c0_i32_2 = arith.constant 0 : i32
    %5 = arith.cmpi eq, %arg1, %c0_i32_2 : i32
    %6 = arith.extui %5 : i1 to i32
    %c0_i32_3 = arith.constant 0 : i32
    %7 = arith.cmpi ne, %6, %c0_i32_3 : i32
    scf.if %7 {
      %cst_40 = arith.constant -1.000000e+30 : f32
      %87 = vector.broadcast %cst_40 : f32 to vector<128x1xf32>
      %c0_41 = arith.constant 0 : index
      %c0_42 = arith.constant 0 : index
      %88 = vector.load %arg5[%c0_41, %c0_42] : memref<128x1xf32, #tpu.memory_space<vmem>>, vector<128x1xf32>
      tpu.vector_store %arg5[%c0_41, %c0_42], %87 {strides = array<i32>} : memref<128x1xf32, #tpu.memory_space<vmem>>, vector<128x1xf32>,
      %cst_43 = arith.constant 0.000000e+00 : f32
      %89 = vector.broadcast %cst_43 : f32 to vector<128x1xf32>
      %c0_44 = arith.constant 0 : index
      %c0_45 = arith.constant 0 : index
      %90 = vector.load %arg6[%c0_44, %c0_45] : memref<128x1xf32, #tpu.memory_space<vmem>>, vector<128x1xf32>
      tpu.vector_store %arg6[%c0_44, %c0_45], %89 {strides = array<i32>} : memref<128x1xf32, #tpu.memory_space<vmem>>, vector<128x1xf32>,
    } else {
    }
    %c0_i32_4 = arith.constant 0 : i32
    %8 = arith.cmpi eq, %arg0, %c0_i32_4 : i32
    %9 = arith.extui %8 : i1 to i32
    %c0_i32_5 = arith.constant 0 : i32
    %10 = arith.cmpi ne, %9, %c0_i32_5 : i32
    scf.if %10 {
      %cst_40 = arith.constant -1.000000e+30 : f32
      %87 = vector.broadcast %cst_40 : f32 to vector<8x128xf32>
      %88 = arith.index_cast %arg1 : i32 to index
      %c0_41 = arith.constant 0 : index
      %c0_42 = arith.constant 0 : index
      %89 = vector.load %arg7[%88, %c0_41, %c0_42] : memref<1x8x128xf32, #tpu.memory_space<vmem>>, vector<1x8x128xf32>
      %90 = vector.shape_cast %89 : vector<1x8x128xf32> to vector<8x128xf32>
      %91 = vector.shape_cast %87 : vector<8x128xf32> to vector<1x8x128xf32>
      tpu.vector_store %arg7[%88, %c0_41, %c0_42], %91 {strides = array<i32>} : memref<1x8x128xf32, #tpu.memory_space<vmem>>, vector<1x8x128xf32>,
      %cst_43 = arith.constant 0.000000e+00 : f32
      %92 = vector.broadcast %cst_43 : f32 to vector<8x128xf32>
      %93 = arith.index_cast %arg1 : i32 to index
      %c0_44 = arith.constant 0 : index
      %c0_45 = arith.constant 0 : index
      %94 = vector.load %arg8[%93, %c0_44, %c0_45] : memref<1x8x128xf32, #tpu.memory_space<vmem>>, vector<1x8x128xf32>
      %95 = vector.shape_cast %94 : vector<1x8x128xf32> to vector<8x128xf32>
      %96 = vector.shape_cast %92 : vector<8x128xf32> to vector<1x8x128xf32>
      tpu.vector_store %arg8[%93, %c0_44, %c0_45], %96 {strides = array<i32>} : memref<1x8x128xf32, #tpu.memory_space<vmem>>, vector<1x8x128xf32>,
    } else {
    }
    %c0 = arith.constant 0 : index
    %c0_6 = arith.constant 0 : index
    %11 = vector.load %arg2[%c0, %c0_6] : memref<128x32xf32, #tpu.memory_space<vmem>>, vector<128x32xf32>
    %c0_7 = arith.constant 0 : index
    %c0_8 = arith.constant 0 : index
    %12 = vector.load %arg3[%c0_7, %c0_8] : memref<128x32xf32, #tpu.memory_space<vmem>>, vector<128x32xf32>
    %cst = arith.constant dense<0.000000e+00> : vector<128x128xf32>
    %13 = tpu.matmul %11, %12, %cst {dimension_numbers = #tpu.dot_dimension_numbers<[1], [1], [0], [0], [0, 0, 1, 0], [], []>} : vector<128x32xf32>, vector<128x32xf32>, vector<128x128xf32> -> vector<128x128xf32>
    %c128_i32 = arith.constant 128 : i32
    %14 = arith.muli %arg0, %c128_i32 : i32
    %15 = tpu.iota {dimensions = array<i32: 0>} : vector<128x1xi32>
    %16 = vector.broadcast %14 : i32 to vector<128x1xi32>
    %17 = arith.addi %16, %15 : vector<128x1xi32>
    %c128_i32_9 = arith.constant 128 : i32
    %18 = arith.muli %arg1, %c128_i32_9 : i32
    %19 = tpu.iota {dimensions = array<i32: 1>} : vector<1x128xi32>
    %20 = vector.broadcast %18 : i32 to vector<1x128xi32>
    %21 = arith.addi %20, %19 : vector<1x128xi32>
    %c8_i32 = arith.constant 8 : i32
    %22 = vector.broadcast %c8_i32 : i32 to vector<128x1xi32>
    %23 = arith.cmpi slt, %17, %22 : vector<128x1xi32>
    %c8_i32_10 = arith.constant 8 : i32
    %24 = vector.broadcast %c8_i32_10 : i32 to vector<1x128xi32>
    %25 = arith.cmpi slt, %21, %24 : vector<1x128xi32>
    %26 = vector.broadcast %23 : vector<128x1xi1> to vector<128x128xi1>
    %27 = vector.broadcast %25 : vector<1x128xi1> to vector<128x128xi1>
    %28 = arith.andi %26, %27 : vector<128x128xi1>
    %cst_11 = arith.constant -1.000000e+30 : f32
    %29 = vector.broadcast %cst_11 : f32 to vector<128x128xf32>
    %30 = arith.select %28, %13, %29 : vector<128x128xi1>, vector<128x128xf32>
    %c0_12 = arith.constant 0 : index
    %c0_13 = arith.constant 0 : index
    %31 = vector.load %arg5[%c0_12, %c0_13] : memref<128x1xf32, #tpu.memory_space<vmem>>, vector<128x1xf32>
    %cst_14 = arith.constant dense<0xFF800000> : vector<128xf32>
    %32 = vector.multi_reduction <maximumf>, %30, %cst_14 [1] : vector<128x128xf32> to vector<128xf32>
    %33 = vector.shape_cast %32 : vector<128xf32> to vector<128x1xf32>
    %34 = arith.maximumf %31, %33 : vector<128x1xf32>
    %35 = vector.broadcast %34 : vector<128x1xf32> to vector<128x128xf32>
    %36 = arith.subf %30, %35 : vector<128x128xf32>
    %37 = math.exp %36 : vector<128x128xf32>
    %38 = arith.subf %31, %34 : vector<128x1xf32>
    %39 = math.exp %38 : vector<128x1xf32>
    %c0_15 = arith.constant 0 : index
    %c0_16 = arith.constant 0 : index
    %40 = vector.load %arg6[%c0_15, %c0_16] : memref<128x1xf32, #tpu.memory_space<vmem>>, vector<128x1xf32>
    %41 = arith.mulf %39, %40 : vector<128x1xf32>
    %cst_17 = arith.constant dense<0.000000e+00> : vector<128xf32>
    %42 = vector.multi_reduction <add>, %37, %cst_17 [1] : vector<128x128xf32> to vector<128xf32>
    %43 = vector.shape_cast %42 : vector<128xf32> to vector<128x1xf32>
    %44 = arith.addf %41, %43 : vector<128x1xf32>
    %c0_18 = arith.constant 0 : index
    %c0_19 = arith.constant 0 : index
    %45 = vector.load %arg6[%c0_18, %c0_19] : memref<128x1xf32, #tpu.memory_space<vmem>>, vector<128x1xf32>
    tpu.vector_store %arg6[%c0_18, %c0_19], %44 {strides = array<i32>} : memref<128x1xf32, #tpu.memory_space<vmem>>, vector<128x1xf32>,
    %c0_20 = arith.constant 0 : index
    %c0_21 = arith.constant 0 : index
    %46 = vector.load %arg5[%c0_20, %c0_21] : memref<128x1xf32, #tpu.memory_space<vmem>>, vector<128x1xf32>
    tpu.vector_store %arg5[%c0_20, %c0_21], %34 {strides = array<i32>} : memref<128x1xf32, #tpu.memory_space<vmem>>, vector<128x1xf32>,
    %47 = vector.shape_cast %30 : vector<128x128xf32> to vector<16x8x128xf32>
    %cst_22 = arith.constant dense<0xFF800000> : vector<8x128xf32>
    %48 = vector.multi_reduction <maximumf>, %47, %cst_22 [0] : vector<16x8x128xf32> to vector<8x128xf32>
    %49 = arith.index_cast %arg1 : i32 to index
    %c0_23 = arith.constant 0 : index
    %c0_24 = arith.constant 0 : index
    %50 = vector.load %arg7[%49, %c0_23, %c0_24] : memref<1x8x128xf32, #tpu.memory_space<vmem>>, vector<1x8x128xf32>
    %51 = vector.shape_cast %50 : vector<1x8x128xf32> to vector<8x128xf32>
    %52 = arith.maximumf %51, %48 : vector<8x128xf32>
    %53 = vector.shape_cast %52 : vector<8x128xf32> to vector<1x8x128xf32>
    %54 = vector.broadcast %53 : vector<1x8x128xf32> to vector<16x8x128xf32>
    %55 = arith.subf %47, %54 : vector<16x8x128xf32>
    %56 = math.exp %55 : vector<16x8x128xf32>
    %57 = arith.subf %51, %52 : vector<8x128xf32>
    %58 = math.exp %57 : vector<8x128xf32>
    %59 = arith.index_cast %arg1 : i32 to index
    %c0_25 = arith.constant 0 : index
    %c0_26 = arith.constant 0 : index
    %60 = vector.load %arg8[%59, %c0_25, %c0_26] : memref<1x8x128xf32, #tpu.memory_space<vmem>>, vector<1x8x128xf32>
    %61 = vector.shape_cast %60 : vector<1x8x128xf32> to vector<8x128xf32>
    %62 = arith.mulf %58, %61 : vector<8x128xf32>
    %cst_27 = arith.constant dense<0.000000e+00> : vector<8x128xf32>
    %63 = vector.multi_reduction <add>, %56, %cst_27 [0] : vector<16x8x128xf32> to vector<8x128xf32>
    %64 = arith.addf %62, %63 : vector<8x128xf32>
    %65 = arith.index_cast %arg1 : i32 to index
    %c0_28 = arith.constant 0 : index
    %c0_29 = arith.constant 0 : index
    %66 = vector.load %arg8[%65, %c0_28, %c0_29] : memref<1x8x128xf32, #tpu.memory_space<vmem>>, vector<1x8x128xf32>
    %67 = vector.shape_cast %66 : vector<1x8x128xf32> to vector<8x128xf32>
    %68 = vector.shape_cast %64 : vector<8x128xf32> to vector<1x8x128xf32>
    tpu.vector_store %arg8[%65, %c0_28, %c0_29], %68 {strides = array<i32>} : memref<1x8x128xf32, #tpu.memory_space<vmem>>, vector<1x8x128xf32>,
    %69 = arith.index_cast %arg1 : i32 to index
    %c0_30 = arith.constant 0 : index
    %c0_31 = arith.constant 0 : index
    %70 = vector.load %arg7[%69, %c0_30, %c0_31] : memref<1x8x128xf32, #tpu.memory_space<vmem>>, vector<1x8x128xf32>
    %71 = vector.shape_cast %70 : vector<1x8x128xf32> to vector<8x128xf32>
    %72 = vector.shape_cast %52 : vector<8x128xf32> to vector<1x8x128xf32>
    tpu.vector_store %arg7[%69, %c0_30, %c0_31], %72 {strides = array<i32>} : memref<1x8x128xf32, #tpu.memory_space<vmem>>, vector<1x8x128xf32>,
    %73 = arith.cmpi eq, %arg1, %arg0 : i32
    %74 = arith.extui %73 : i1 to i32
    %c0_i32_32 = arith.constant 0 : i32
    %75 = arith.cmpi ne, %74, %c0_i32_32 : i32
    scf.if %75 {
      %87 = arith.mulf %11, %12 : vector<128x32xf32>
      %cst_40 = arith.constant dense<0.000000e+00> : vector<128xf32>
      %88 = vector.multi_reduction <add>, %87, %cst_40 [1] : vector<128x32xf32> to vector<128xf32>
      %89 = vector.shape_cast %88 : vector<128xf32> to vector<128x1xf32>
      %c0_41 = arith.constant 0 : index
      %c0_42 = arith.constant 0 : index
      %90 = vector.load %arg11[%c0_41, %c0_42] : memref<128x1xf32, #tpu.memory_space<vmem>>, vector<128x1xf32>
      %cst_43 = arith.constant 0.000000e+00 : f32
      %91 = vector.broadcast %cst_43 : f32 to vector<128x1xf32>
      %92 = arith.select %23, %89, %91 : vector<128x1xi1>, vector<128x1xf32>
      %93 = arith.addf %90, %92 : vector<128x1xf32>
      %c0_44 = arith.constant 0 : index
      %c0_45 = arith.constant 0 : index
      %94 = vector.load %arg11[%c0_44, %c0_45] : memref<128x1xf32, #tpu.memory_space<vmem>>, vector<128x1xf32>
      tpu.vector_store %arg11[%c0_44, %c0_45], %93 {strides = array<i32>} : memref<128x1xf32, #tpu.memory_space<vmem>>, vector<128x1xf32>,
    } else {
    }
    %c0_i32_33 = arith.constant 0 : i32
    %76 = arith.cmpi eq, %arg1, %c0_i32_33 : i32
    %77 = arith.extui %76 : i1 to i32
    %c0_i32_34 = arith.constant 0 : i32
    %78 = arith.cmpi ne, %77, %c0_i32_34 : i32
    scf.if %78 {
      %c0_40 = arith.constant 0 : index
      %c0_41 = arith.constant 0 : index
      %87 = vector.load %arg5[%c0_40, %c0_41] : memref<128x1xf32, #tpu.memory_space<vmem>>, vector<128x1xf32>
      %c0_42 = arith.constant 0 : index
      %c0_43 = arith.constant 0 : index
      %88 = vector.load %arg6[%c0_42, %c0_43] : memref<128x1xf32, #tpu.memory_space<vmem>>, vector<128x1xf32>
      %89 = math.log %88 : vector<128x1xf32>
      %90 = arith.addf %87, %89 : vector<128x1xf32>
      %c0_44 = arith.constant 0 : index
      %c0_45 = arith.constant 0 : index
      %91 = vector.load %arg9[%c0_44, %c0_45] : memref<128x1xf32, #tpu.memory_space<vmem>>, vector<128x1xf32>
      %cst_46 = arith.constant 0.000000e+00 : f32
      %92 = vector.broadcast %cst_46 : f32 to vector<128x1xf32>
      %93 = arith.select %23, %90, %92 : vector<128x1xi1>, vector<128x1xf32>
      %94 = arith.addf %91, %93 : vector<128x1xf32>
      %c0_47 = arith.constant 0 : index
      %c0_48 = arith.constant 0 : index
      %95 = vector.load %arg9[%c0_47, %c0_48] : memref<128x1xf32, #tpu.memory_space<vmem>>, vector<128x1xf32>
      tpu.vector_store %arg9[%c0_47, %c0_48], %94 {strides = array<i32>} : memref<128x1xf32, #tpu.memory_space<vmem>>, vector<128x1xf32>,
    } else {
    }
    %c0_i32_35 = arith.constant 0 : i32
    %79 = arith.cmpi eq, %arg0, %c0_i32_35 : i32
    %80 = arith.extui %79 : i1 to i32
    %c0_i32_36 = arith.constant 0 : i32
    %81 = arith.cmpi ne, %80, %c0_i32_36 : i32
    scf.if %81 {
      %87 = arith.index_cast %arg1 : i32 to index
      %c0_40 = arith.constant 0 : index
      %c0_41 = arith.constant 0 : index
      %88 = vector.load %arg7[%87, %c0_40, %c0_41] : memref<1x8x128xf32, #tpu.memory_space<vmem>>, vector<1x8x128xf32>
      %89 = vector.shape_cast %88 : vector<1x8x128xf32> to vector<8x128xf32>
      %90 = arith.index_cast %arg1 : i32 to index
      %c0_42 = arith.constant 0 : index
      %c0_43 = arith.constant 0 : index
      %91 = vector.load %arg8[%90, %c0_42, %c0_43] : memref<1x8x128xf32, #tpu.memory_space<vmem>>, vector<1x8x128xf32>
      %92 = vector.shape_cast %91 : vector<1x8x128xf32> to vector<8x128xf32>
      %cst_44 = arith.constant dense<0xFF800000> : vector<128xf32>
      %93 = vector.multi_reduction <maximumf>, %89, %cst_44 [0] : vector<8x128xf32> to vector<128xf32>
      %94 = vector.shape_cast %93 : vector<128xf32> to vector<1x128xf32>
      %95 = vector.broadcast %94 : vector<1x128xf32> to vector<8x128xf32>
      %96 = arith.subf %89, %95 : vector<8x128xf32>
      %97 = math.exp %96 : vector<8x128xf32>
      %98 = arith.mulf %92, %97 : vector<8x128xf32>
      %cst_45 = arith.constant dense<0.000000e+00> : vector<128xf32>
      %99 = vector.multi_reduction <add>, %98, %cst_45 [0] : vector<8x128xf32> to vector<128xf32>
      %100 = vector.shape_cast %99 : vector<128xf32> to vector<1x128xf32>
      %101 = math.log %100 : vector<1x128xf32>
      %102 = arith.addf %94, %101 : vector<1x128xf32>
      %c0_46 = arith.constant 0 : index
      %c0_47 = arith.constant 0 : index
      %103 = vector.load %arg10[%c0_46, %c0_47] : memref<1x128xf32, #tpu.memory_space<vmem>>, vector<1x128xf32>
      %cst_48 = arith.constant 0.000000e+00 : f32
      %104 = vector.broadcast %cst_48 : f32 to vector<1x128xf32>
      %105 = arith.select %25, %102, %104 : vector<1x128xi1>, vector<1x128xf32>
      %106 = arith.addf %103, %105 : vector<1x128xf32>
      %c0_49 = arith.constant 0 : index
      %c0_50 = arith.constant 0 : index
      %107 = vector.load %arg10[%c0_49, %c0_50] : memref<1x128xf32, #tpu.memory_space<vmem>>, vector<1x128xf32>
      tpu.vector_store %arg10[%c0_49, %c0_50], %106 {strides = array<i32>} : memref<1x128xf32, #tpu.memory_space<vmem>>, vector<1x128xf32>,
    } else {
    }
    %c0_i32_37 = arith.constant 0 : i32
    %82 = arith.cmpi eq, %arg0, %c0_i32_37 : i32
    %c0_i32_38 = arith.constant 0 : i32
    %83 = arith.cmpi eq, %arg1, %c0_i32_38 : i32
    %84 = arith.andi %82, %83 : i1
    %85 = arith.extui %84 : i1 to i32
    %c0_i32_39 = arith.constant 0 : i32
    %86 = arith.cmpi ne, %85, %c0_i32_39 : i32
    scf.if %86 {
      %c0_40 = arith.constant 0 : index
      %c0_41 = arith.constant 0 : index
      %87 = vector.load %arg9[%c0_40, %c0_41] : memref<128x1xf32, #tpu.memory_space<vmem>>, vector<128x1xf32>
      %88 = vector.shape_cast %87 : vector<128x1xf32> to vector<1x128x1xf32>
      %cst_42 = arith.constant dense<0.000000e+00> : vector<1xf32>
      %89 = vector.multi_reduction <add>, %88, %cst_42 [1, 2] : vector<1x128x1xf32> to vector<1xf32>
      %90 = vector.shape_cast %89 : vector<1xf32> to vector<1x1x1xf32>
      %91 = vector.extract %90[0, 0, 0] : f32 from vector<1x1x1xf32>
      %c0_43 = arith.constant 0 : index
      %c0_44 = arith.constant 0 : index
      %92 = vector.load %arg10[%c0_43, %c0_44] : memref<1x128xf32, #tpu.memory_space<vmem>>, vector<1x128xf32>
      %93 = vector.shape_cast %92 : vector<1x128xf32> to vector<1x1x128xf32>
      %cst_45 = arith.constant dense<0.000000e+00> : vector<1xf32>
      %94 = vector.multi_reduction <add>, %93, %cst_45 [1, 2] : vector<1x1x128xf32> to vector<1xf32>
      %95 = vector.shape_cast %94 : vector<1xf32> to vector<1x1x1xf32>
      %96 = vector.extract %95[0, 0, 0] : f32 from vector<1x1x1xf32>
      %97 = arith.addf %91, %96 : f32
      %cst_46 = arith.constant 5.000000e-01 : f32
      %98 = arith.mulf %cst_46, %97 : f32
      %c0_47 = arith.constant 0 : index
      %c0_48 = arith.constant 0 : index
      %99 = vector.load %arg11[%c0_47, %c0_48] : memref<128x1xf32, #tpu.memory_space<vmem>>, vector<128x1xf32>
      %100 = vector.shape_cast %99 : vector<128x1xf32> to vector<1x128x1xf32>
      %cst_49 = arith.constant dense<0.000000e+00> : vector<1xf32>
      %101 = vector.multi_reduction <add>, %100, %cst_49 [1, 2] : vector<1x128x1xf32> to vector<1xf32>
      %102 = vector.shape_cast %101 : vector<1xf32> to vector<1x1x1xf32>
      %103 = vector.extract %102[0, 0, 0] : f32 from vector<1x1x1xf32>
      %104 = arith.subf %98, %103 : f32
      %cst_50 = arith.constant 8.000000e+00 : f32
      %105 = arith.divf %104, %cst_50 : f32
      %cst_51 = arith.constant 0.000000e+00 : f32
      %106 = vector.broadcast %cst_51 : f32 to vector<8x128xf32>
      %107 = vector.broadcast %105 : f32 to vector<8x128xf32>
      %108 = arith.addf %106, %107 : vector<8x128xf32>
      %c0_52 = arith.constant 0 : index
      %c0_53 = arith.constant 0 : index
      %109 = vector.load %arg4[%c0_52, %c0_53] : memref<8x128xf32, #tpu.memory_space<vmem>>, vector<8x128xf32>
      tpu.vector_store %arg4[%c0_52, %c0_53], %108 {strides = array<i32>} : memref<8x128xf32, #tpu.memory_space<vmem>>, vector<8x128xf32>,
    } else {
    }
    return
  }
  func.func @transform_0(%arg0: i32, %arg1: i32) -> (i32, i32) {
    %c0_i32 = arith.constant 0 : i32
    %c0_i32_0 = arith.constant 0 : i32
    return %arg0, %c0_i32 : i32, i32
  }
  func.func @transform_1(%arg0: i32, %arg1: i32) -> (i32, i32) {
    %c0_i32 = arith.constant 0 : i32
    %c0_i32_0 = arith.constant 0 : i32
    return %arg1, %c0_i32 : i32, i32
  }
  func.func @transform_2(%arg0: i32, %arg1: i32) -> (i32, i32) {
    %c0_i32 = arith.constant 0 : i32
    %c0_i32_0 = arith.constant 0 : i32
    %c0_i32_1 = arith.constant 0 : i32
    return %c0_i32, %c0_i32_0 : i32, i32
  }
}

</mosaic_0001>

<llo_original>
// kernel: tpu_custom_call.1
$region0: #{tpu_custom_call.1}
  #allocation0 [shape = 'u32[]', space=smem, size = 0x4, offset = 0x4, fixed_abs, tag = 'smem constant byte address 0x4 - core index']
  #allocation1 [shape = 'u32[144,128]{1,0:T(1,128)}', space=vmem, size = 0x12000, scoped, tag = 'internal scratch']
  #allocation2 [shape = 'f32[128,1]{1,0:T(8,128)}', space=vmem, size = 0x10000, scoped, tag = 'scratch operand']
  #allocation3 [shape = 'f32[128,1]{1,0:T(8,128)}', space=vmem, size = 0x10000, scoped, tag = 'scratch operand']
  #allocation4 [shape = 'f32[1,8,128]{2,1,0:T(8,128)}', space=vmem, size = 0x1000, scoped, tag = 'scratch operand']
  #allocation5 [shape = 'f32[1,8,128]{2,1,0:T(8,128)}', space=vmem, size = 0x1000, scoped, tag = 'scratch operand']
  #allocation6 [shape = 'f32[128,1]{1,0:T(8,128)}', space=vmem, size = 0x10000, scoped, tag = 'scratch operand']
  #allocation7 [shape = 'f32[1,128]{1,0:T(1,128)}', space=vmem, size = 0x200, scoped, tag = 'scratch operand']
  #allocation8 [shape = 'f32[128,1]{1,0:T(8,128)}', space=vmem, size = 0x10000, scoped, tag = 'scratch operand']
  %s0 = inlined_call_operand.vmem [shape: f32[128,32], index: 0, kind: input, shape index: {}]
  %s1 = inlined_call_operand.vmem [shape: f32[128,32], index: 1, kind: input, shape index: {}]
  %s2 = inlined_call_operand.hbm [shape: f32[8,128], index: 2, kind: output, shape index: {}]
  %s3 = sld [smem:[#allocation0]]
  $region46: #{tpu_custom_call.1} parent=0
    _
  %s5 = ssub.s32 1, %s3
  %s6 = scalar_select 0, %s5, %s3
  $region1: #{tpu_custom_call.1} parent=0
    #allocation9 [shape = 'u8[4096]{0}', space=vmem, size = 0x1000, scoped, tag = 'output window, operand 0, single buffered']
    #allocation10 [shape = 's32[1]{0}', space=sflag, size = 0x4, scoped, tag = 'scoped memory for tpu_custom_call.1']
    %7 = vsyncpa [#allocation10], 0
    // Predicated region
    $region2: #{tpu_custom_call.1} parent=1 // pred_check
      _
    $region3: #{tpu_custom_call.1} parent=1 // pred_check_branch
      %9 = sbr.rel (0) target = $region5
    $region4: #{tpu_custom_call.1} parent=1 // pred_region
      _
    $region5: #{tpu_custom_call.1} parent=1 // pred_fallthru
      _
    // Predicated region
    $region6: #{tpu_custom_call.1} parent=1 // pred_check
      _
    $region7: #{tpu_custom_call.1} parent=1 // pred_check_branch
      %11 = sbr.rel (0) target = $region9
    $region8: #{tpu_custom_call.1} parent=1 // pred_region
      _
    $region9: #{tpu_custom_call.1} parent=1 // pred_fallthru
      _
    %p12 = scmp.eq.s32.totalorder 0, 0
    %p13 = scmp.eq.s32.totalorder 0, 0
    %p14 = pnand %p12, %p13
    %p15 = pneg %p14
    // Predicated region
    $region10: #{tpu_custom_call.1} parent=1 // pred_check
      _
    $region11: #{tpu_custom_call.1} parent=1 // pred_check_branch
      %17 = sbr.rel (%p14) target = $region13
    $region12: #{tpu_custom_call.1} parent=1 // pred_region
      %vm18 = vcmask 7168
      %19 = vst.msk [vmem:[#allocation6] sm:$0xff] %vm18, 0.0
      %20 = vst.msk [vmem:[#allocation6 + $0x8] sm:$0xff] %vm18, 0.0
      %21 = vst.msk [vmem:[#allocation6 + $0x10] sm:$0xff] %vm18, 0.0
      %22 = vst.msk [vmem:[#allocation6 + $0x18] sm:$0xff] %vm18, 0.0
      %23 = vst.msk [vmem:[#allocation6 + $0x20] sm:$0xff] %vm18, 0.0
      %24 = vst.msk [vmem:[#allocation6 + $0x28] sm:$0xff] %vm18, 0.0
      %25 = vst.msk [vmem:[#allocation6 + $0x30] sm:$0xff] %vm18, 0.0
      %26 = vst.msk [vmem:[#allocation6 + $0x38] sm:$0xff] %vm18, 0.0
      %27 = vst.msk [vmem:[#allocation6 + $0x40] sm:$0xff] %vm18, 0.0
      %28 = vst.msk [vmem:[#allocation6 + $0x48] sm:$0xff] %vm18, 0.0
      %29 = vst.msk [vmem:[#allocation6 + $0x50] sm:$0xff] %vm18, 0.0
      %30 = vst.msk [vmem:[#allocation6 + $0x58] sm:$0xff] %vm18, 0.0
      %31 = vst.msk [vmem:[#allocation6 + $0x60] sm:$0xff] %vm18, 0.0
      %32 = vst.msk [vmem:[#allocation6 + $0x68] sm:$0xff] %vm18, 0.0
      %33 = vst.msk [vmem:[#allocation6 + $0x70] sm:$0xff] %vm18, 0.0
      %34 = vst.msk [vmem:[#allocation6 + $0x78] sm:$0xff] %vm18, 0.0
      %35 = vst [vmem:[#allocation7] sm:$0x1] 0.0
      %36 = vst.msk [vmem:[#allocation8] sm:$0xff] %vm18, 0.0
      %37 = vst.msk [vmem:[#allocation8 + $0x8] sm:$0xff] %vm18, 0.0
      %38 = vst.msk [vmem:[#allocation8 + $0x10] sm:$0xff] %vm18, 0.0
      %39 = vst.msk [vmem:[#allocation8 + $0x18] sm:$0xff] %vm18, 0.0
      %40 = vst.msk [vmem:[#allocation8 + $0x20] sm:$0xff] %vm18, 0.0
      %41 = vst.msk [vmem:[#allocation8 + $0x28] sm:$0xff] %vm18, 0.0
      %42 = vst.msk [vmem:[#allocation8 + $0x30] sm:$0xff] %vm18, 0.0
      %43 = vst.msk [vmem:[#allocation8 + $0x38] sm:$0xff] %vm18, 0.0
      %44 = vst.msk [vmem:[#allocation8 + $0x40] sm:$0xff] %vm18, 0.0
      %45 = vst.msk [vmem:[#allocation8 + $0x48] sm:$0xff] %vm18, 0.0
      %46 = vst.msk [vmem:[#allocation8 + $0x50] sm:$0xff] %vm18, 0.0
      %47 = vst.msk [vmem:[#allocation8 + $0x58] sm:$0xff] %vm18, 0.0
      %48 = vst.msk [vmem:[#allocation8 + $0x60] sm:$0xff] %vm18, 0.0
      %49 = vst.msk [vmem:[#allocation8 + $0x68] sm:$0xff] %vm18, 0.0
      %50 = vst.msk [vmem:[#allocation8 + $0x70] sm:$0xff] %vm18, 0.0
      %51 = vst.msk [vmem:[#allocation8 + $0x78] sm:$0xff] %vm18, 0.0
    $region13: #{tpu_custom_call.1} parent=1 // pred_fallthru
      _
    // Predicated region
    $region14: #{tpu_custom_call.1} parent=1 // pred_check
      %p52 = pneg %p13
    $region15: #{tpu_custom_call.1} parent=1 // pred_check_branch
      %54 = sbr.rel (%p52) target = $region17
    $region16: #{tpu_custom_call.1} parent=1 // pred_region
      %vm55 = vcmask 7168
      %56 = vst.msk [vmem:[#allocation2] sm:$0xff] %vm55, -1e+30
      %57 = vst.msk [vmem:[#allocation2 + $0x8] sm:$0xff] %vm55, -1e+30
      %58 = vst.msk [vmem:[#allocation2 + $0x10] sm:$0xff] %vm55, -1e+30
      %59 = vst.msk [vmem:[#allocation2 + $0x18] sm:$0xff] %vm55, -1e+30
      %60 = vst.msk [vmem:[#allocation2 + $0x20] sm:$0xff] %vm55, -1e+30
      %61 = vst.msk [vmem:[#allocation2 + $0x28] sm:$0xff] %vm55, -1e+30
      %62 = vst.msk [vmem:[#allocation2 + $0x30] sm:$0xff] %vm55, -1e+30
      %63 = vst.msk [vmem:[#allocation2 + $0x38] sm:$0xff] %vm55, -1e+30
      %64 = vst.msk [vmem:[#allocation2 + $0x40] sm:$0xff] %vm55, -1e+30
      %65 = vst.msk [vmem:[#allocation2 + $0x48] sm:$0xff] %vm55, -1e+30
      %66 = vst.msk [vmem:[#allocation2 + $0x50] sm:$0xff] %vm55, -1e+30
      %67 = vst.msk [vmem:[#allocation2 + $0x58] sm:$0xff] %vm55, -1e+30
      %68 = vst.msk [vmem:[#allocation2 + $0x60] sm:$0xff] %vm55, -1e+30
      %69 = vst.msk [vmem:[#allocation2 + $0x68] sm:$0xff] %vm55, -1e+30
      %70 = vst.msk [vmem:[#allocation2 + $0x70] sm:$0xff] %vm55, -1e+30
      %71 = vst.msk [vmem:[#allocation2 + $0x78] sm:$0xff] %vm55, -1e+30
      %72 = vst.msk [vmem:[#allocation3] sm:$0xff] %vm55, 0.0
      %73 = vst.msk [vmem:[#allocation3 + $0x8] sm:$0xff] %vm55, 0.0
      %74 = vst.msk [vmem:[#allocation3 + $0x10] sm:$0xff] %vm55, 0.0
      %75 = vst.msk [vmem:[#allocation3 + $0x18] sm:$0xff] %vm55, 0.0
      %76 = vst.msk [vmem:[#allocation3 + $0x20] sm:$0xff] %vm55, 0.0
      %77 = vst.msk [vmem:[#allocation3 + $0x28] sm:$0xff] %vm55, 0.0
      %78 = vst.msk [vmem:[#allocation3 + $0x30] sm:$0xff] %vm55, 0.0
      %79 = vst.msk [vmem:[#allocation3 + $0x38] sm:$0xff] %vm55, 0.0
      %80 = vst.msk [vmem:[#allocation3 + $0x40] sm:$0xff] %vm55, 0.0
      %81 = vst.msk [vmem:[#allocation3 + $0x48] sm:$0xff] %vm55, 0.0
      %82 = vst.msk [vmem:[#allocation3 + $0x50] sm:$0xff] %vm55, 0.0
      %83 = vst.msk [vmem:[#allocation3 + $0x58] sm:$0xff] %vm55, 0.0
      %84 = vst.msk [vmem:[#allocation3 + $0x60] sm:$0xff] %vm55, 0.0
      %85 = vst.msk [vmem:[#allocation3 + $0x68] sm:$0xff] %vm55, 0.0
      %86 = vst.msk [vmem:[#allocation3 + $0x70] sm:$0xff] %vm55, 0.0
      %87 = vst.msk [vmem:[#allocation3 + $0x78] sm:$0xff] %vm55, 0.0
    $region17: #{tpu_custom_call.1} parent=1 // pred_fallthru
      _
    // Predicated region
    $region18: #{tpu_custom_call.1} parent=1 // pred_check
      %p88 = pneg %p12
    $region19: #{tpu_custom_call.1} parent=1 // pred_check_branch
      %90 = sbr.rel (%p88) target = $region21
    $region20: #{tpu_custom_call.1} parent=1 // pred_region
      %s91 = smul.u32 0, 8
      %s92 = scalar_lea.vmem [#allocation4], %s91
      %93 = vst [vmem:[%s92] sm:$0xff] -1e+30
      %s94 = scalar_lea.vmem [#allocation5], %s91
      %95 = vst [vmem:[%s94] sm:$0xff] 0.0
    $region21: #{tpu_custom_call.1} parent=1 // pred_fallthru
      _
    %v96 = vld [vmem:[%s0] sm:$0xff]
    %v97 = vld [vmem:[%s0 + $0x8] sm:$0xff]
    %v98 = vld [vmem:[%s0 + $0x10] sm:$0xff]
    %v99 = vld [vmem:[%s0 + $0x18] sm:$0xff]
    %v100 = vld [vmem:[%s0 + $0x20] sm:$0xff]
    %v101 = vld [vmem:[%s0 + $0x28] sm:$0xff]
    %v102 = vld [vmem:[%s0 + $0x30] sm:$0xff]
    %v103 = vld [vmem:[%s0 + $0x38] sm:$0xff]
    %v104 = vld [vmem:[%s0 + $0x40] sm:$0xff]
    %v105 = vld [vmem:[%s0 + $0x48] sm:$0xff]
    %v106 = vld [vmem:[%s0 + $0x50] sm:$0xff]
    %v107 = vld [vmem:[%s0 + $0x58] sm:$0xff]
    %v108 = vld [vmem:[%s0 + $0x60] sm:$0xff]
    %v109 = vld [vmem:[%s0 + $0x68] sm:$0xff]
    %v110 = vld [vmem:[%s0 + $0x70] sm:$0xff]
    %v111 = vld [vmem:[%s0 + $0x78] sm:$0xff]
    %v112 = vld [vmem:[%s1] sm:$0xff]
    %v113 = vld [vmem:[%s1 + $0x8] sm:$0xff]
    %v114 = vld [vmem:[%s1 + $0x10] sm:$0xff]
    %v115 = vld [vmem:[%s1 + $0x18] sm:$0xff]
    %v116 = vld [vmem:[%s1 + $0x20] sm:$0xff]
    %v117 = vld [vmem:[%s1 + $0x28] sm:$0xff]
    %v118 = vld [vmem:[%s1 + $0x30] sm:$0xff]
    %v119 = vld [vmem:[%s1 + $0x38] sm:$0xff]
    %v120 = vld [vmem:[%s1 + $0x40] sm:$0xff]
    %v121 = vld [vmem:[%s1 + $0x48] sm:$0xff]
    %v122 = vld [vmem:[%s1 + $0x50] sm:$0xff]
    %v123 = vld [vmem:[%s1 + $0x58] sm:$0xff]
    %v124 = vld [vmem:[%s1 + $0x60] sm:$0xff]
    %v125 = vld [vmem:[%s1 + $0x68] sm:$0xff]
    %v126 = vld [vmem:[%s1 + $0x70] sm:$0xff]
    %v127 = vld [vmem:[%s1 + $0x78] sm:$0xff]
    %vm128 = vcmask 261120
    %v130 = vsel %vm128, %v96, 0
    %v133 = vsel %vm128, %v97, 0
    %v136 = vsel %vm128, %v98, 0
    %v139 = vsel %vm128, %v99, 0
    %v142 = vsel %vm128, %v100, 0
    %v145 = vsel %vm128, %v101, 0
    %v148 = vsel %vm128, %v102, 0
    %v151 = vsel %vm128, %v103, 0
    %v154 = vsel %vm128, %v104, 0
    %v157 = vsel %vm128, %v105, 0
    %v160 = vsel %vm128, %v106, 0
    %v163 = vsel %vm128, %v107, 0
    %v166 = vsel %vm128, %v108, 0
    %v169 = vsel %vm128, %v109, 0
    %v172 = vsel %vm128, %v110, 0
    %v175 = vsel %vm128, %v111, 0
    %v178 = vsel %vm128, %v112, 0
    %v181 = vsel %vm128, %v113, 0
    %v184 = vsel %vm128, %v114, 0
    %v187 = vsel %vm128, %v115, 0
    %v190 = vsel %vm128, %v116, 0
    %v193 = vsel %vm128, %v117, 0
    %v196 = vsel %vm128, %v118, 0
    %v199 = vsel %vm128, %v119, 0
    %v202 = vsel %vm128, %v120, 0
    %v205 = vsel %vm128, %v121, 0
    %v208 = vsel %vm128, %v122, 0
    %v211 = vsel %vm128, %v123, 0
    %v214 = vsel %vm128, %v124, 0
    %v217 = vsel %vm128, %v125, 0
    %v220 = vsel %vm128, %v126, 0
    %v223 = vsel %vm128, %v127, 0
    %225 = vmatprep.subr.mxu0 0.0
    %226 = vmatpush1.xpose.msra.mxu0 %v223
    %227 = vmatprep.subr.mxu0 0.0
    %228 = vmatpush1.xpose.msra.mxu0 %v220
    %229 = vmatprep.subr.mxu0 0.0
    %230 = vmatpush1.xpose.msra.mxu0 %v217
    %231 = vmatprep.subr.mxu0 0.0
    %232 = vmatpush1.xpose.msra.mxu0 %v214
    %233 = vmatprep.subr.mxu0 0.0
    %234 = vmatpush1.xpose.msra.mxu0 %v211
    %235 = vmatprep.subr.mxu0 0.0
    %236 = vmatpush1.xpose.msra.mxu0 %v208
    %237 = vmatprep.subr.mxu0 0.0
    %238 = vmatpush1.xpose.msra.mxu0 %v205
    %239 = vmatprep.subr.mxu0 0.0
    %240 = vmatpush1.xpose.msra.mxu0 %v202
    %241 = vmatprep.subr.mxu0 0.0
    %242 = vmatpush1.xpose.msra.mxu0 %v199
    %243 = vmatprep.subr.mxu0 0.0
    %244 = vmatpush1.xpose.msra.mxu0 %v196
    %245 = vmatprep.subr.mxu0 0.0
    %246 = vmatpush1.xpose.msra.mxu0 %v193
    %247 = vmatprep.subr.mxu0 0.0
    %248 = vmatpush1.xpose.msra.mxu0 %v190
    %249 = vmatprep.subr.mxu0 0.0
    %250 = vmatpush1.xpose.msra.mxu0 %v187
    %251 = vmatprep.subr.mxu0 0.0
    %252 = vmatpush1.xpose.msra.mxu0 %v184
    %253 = vmatprep.subr.mxu0 0.0
    %254 = vmatpush1.xpose.msra.mxu0 %v181
    %255 = vmatprep.subr.mxu0 0.0
    %256 = vmatpush1.xpose.msra.mxu0 %v178
    %257 = vmatprep.subr.mxu0 0.0
    %258 = vmatpush2.xpose.msra.mxu0 0.0
    %259 = vmatprep.subr.mxu0 0.0
    %260 = vmatpush2.xpose.msra.mxu0 0.0
    %261 = vmatprep.subr.mxu0 0.0
    %262 = vmatpush2.xpose.msra.mxu0 0.0
    %263 = vmatprep.subr.mxu0 0.0
    %264 = vmatpush2.xpose.msra.mxu0 0.0
    %265 = vmatprep.subr.mxu0 0.0
    %266 = vmatpush2.xpose.msra.mxu0 0.0
    %267 = vmatprep.subr.mxu0 0.0
    %268 = vmatpush2.xpose.msra.mxu0 0.0
    %269 = vmatprep.subr.mxu0 0.0
    %270 = vmatpush2.xpose.msra.mxu0 0.0
    %271 = vmatprep.subr.mxu0 0.0
    %272 = vmatpush2.xpose.msra.mxu0 0.0
    %273 = vmatprep.subr.mxu0 0.0
    %274 = vmatpush2.xpose.msra.mxu0 0.0
    %275 = vmatprep.subr.mxu0 0.0
    %276 = vmatpush2.xpose.msra.mxu0 0.0
    %277 = vmatprep.subr.mxu0 0.0
    %278 = vmatpush2.xpose.msra.mxu0 0.0
    %279 = vmatprep.subr.mxu0 0.0
    %280 = vmatpush2.xpose.msra.mxu0 0.0
    %281 = vmatprep.subr.mxu0 0.0
    %282 = vmatpush2.xpose.msra.mxu0 0.0
    %283 = vmatprep.subr.mxu0 0.0
    %284 = vmatpush2.xpose.msra.mxu0 0.0
    %285 = vmatprep.subr.mxu0 0.0
    %286 = vmatpush2.xpose.msra.mxu0 0.0
    %287 = vmatprep.subr.mxu0 0.0
    %288 = vmatpush2.xpose.msra.mxu0 0.0
    %289 = vmatprep.mubr.f32.mxu0 0.0
    %290 = vmatmul.mubr.f32.gmra.mxu0 %v130
    %v291 = vpop.f32.mrf.mxu0
    %v292 = vadd.f32 0.0, %v291
    %v293 = vpop.f32.mrf.mxu0
    %294 = vmatprep.mubr.f32.mxu0 0.0
    %295 = vmatmul.mubr.f32.gmra.mxu0 %v133
    %v296 = vpop.f32.mrf.mxu0
    %v297 = vadd.f32 0.0, %v296
    %v298 = vpop.f32.mrf.mxu0
    %299 = vmatprep.mubr.f32.mxu0 0.0
    %300 = vmatmul.mubr.f32.gmra.mxu0 %v136
    %v301 = vpop.f32.mrf.mxu0
    %v302 = vadd.f32 0.0, %v301
    %v303 = vpop.f32.mrf.mxu0
    %304 = vmatprep.mubr.f32.mxu0 0.0
    %305 = vmatmul.mubr.f32.gmra.mxu0 %v139
    %v306 = vpop.f32.mrf.mxu0
    %v307 = vadd.f32 0.0, %v306
    %v308 = vpop.f32.mrf.mxu0
    %309 = vmatprep.mubr.f32.mxu0 0.0
    %310 = vmatmul.mubr.f32.gmra.mxu0 %v142
    %v311 = vpop.f32.mrf.mxu0
    %v312 = vadd.f32 0.0, %v311
    %v313 = vpop.f32.mrf.mxu0
    %314 = vmatprep.mubr.f32.mxu0 0.0
    %315 = vmatmul.mubr.f32.gmra.mxu0 %v145
    %v316 = vpop.f32.mrf.mxu0
    %v317 = vadd.f32 0.0, %v316
    %v318 = vpop.f32.mrf.mxu0
    %319 = vmatprep.mubr.f32.mxu0 0.0
    %320 = vmatmul.mubr.f32.gmra.mxu0 %v148
    %v321 = vpop.f32.mrf.mxu0
    %v322 = vadd.f32 0.0, %v321
    %v323 = vpop.f32.mrf.mxu0
    %324 = vmatprep.mubr.f32.mxu0 0.0
    %325 = vmatmul.mubr.f32.gmra.mxu0 %v151
    %v326 = vpop.f32.mrf.mxu0
    %v327 = vadd.f32 0.0, %v326
    %v328 = vpop.f32.mrf.mxu0
    %329 = vmatprep.mubr.f32.mxu0 0.0
    %330 = vmatmul.mubr.f32.gmra.mxu0 %v154
    %v331 = vpop.f32.mrf.mxu0
    %v332 = vadd.f32 0.0, %v331
    %v333 = vpop.f32.mrf.mxu0
    %334 = vmatprep.mubr.f32.mxu0 0.0
    %335 = vmatmul.mubr.f32.gmra.mxu0 %v157
    %v336 = vpop.f32.mrf.mxu0
    %v337 = vadd.f32 0.0, %v336
    %v338 = vpop.f32.mrf.mxu0
    %339 = vmatprep.mubr.f32.mxu0 0.0
    %340 = vmatmul.mubr.f32.gmra.mxu0 %v160
    %v341 = vpop.f32.mrf.mxu0
    %v342 = vadd.f32 0.0, %v341
    %v343 = vpop.f32.mrf.mxu0
    %344 = vmatprep.mubr.f32.mxu0 0.0
    %345 = vmatmul.mubr.f32.gmra.mxu0 %v163
    %v346 = vpop.f32.mrf.mxu0
    %v347 = vadd.f32 0.0, %v346
    %v348 = vpop.f32.mrf.mxu0
    %349 = vmatprep.mubr.f32.mxu0 0.0
    %350 = vmatmul.mubr.f32.gmra.mxu0 %v166
    %v351 = vpop.f32.mrf.mxu0
    %v352 = vadd.f32 0.0, %v351
    %v353 = vpop.f32.mrf.mxu0
    %354 = vmatprep.mubr.f32.mxu0 0.0
    %355 = vmatmul.mubr.f32.gmra.mxu0 %v169
    %v356 = vpop.f32.mrf.mxu0
    %v357 = vadd.f32 0.0, %v356
    %v358 = vpop.f32.mrf.mxu0
    %359 = vmatprep.mubr.f32.mxu0 0.0
    %360 = vmatmul.mubr.f32.gmra.mxu0 %v172
    %v361 = vpop.f32.mrf.mxu0
    %v362 = vadd.f32 0.0, %v361
    %v363 = vpop.f32.mrf.mxu0
    %364 = vmatprep.mubr.f32.mxu0 0.0
    %365 = vmatmul.mubr.f32.gmra.mxu0 %v175
    %v366 = vpop.f32.mrf.mxu0
    %v367 = vadd.f32 0.0, %v366
    %v368 = vpop.f32.mrf.mxu0
    %369 = vdwg.mxu0
    %s370 = smul.u32 0, 128
    %v371 = vlaneseq
    %v372 = vshrl.u32 %v371, 7
    %v373 = vadd.s32 %v372, 8
    %v374 = vadd.s32 %v372, 16
    %v375 = vadd.s32 %v372, 24
    %v376 = vadd.s32 %v372, 32
    %v377 = vadd.s32 %v372, 40
    %v378 = vadd.s32 %v372, 48
    %v379 = vadd.s32 %v372, 56
    %v380 = vadd.s32 %v372, 64
    %v381 = vadd.s32 %v372, 72
    %v382 = vadd.s32 %v372, 80
    %v383 = vadd.s32 %v372, 88
    %v384 = vadd.s32 %v372, 96
    %v385 = vadd.s32 %v372, 104
    %v386 = vadd.s32 %v372, 112
    %v387 = vadd.s32 %v372, 120
    %v388 = vstv %s370
    %v389 = vadd.s32 %v388, %v372
    %v390 = vadd.s32 %v388, %v373
    %v391 = vadd.s32 %v388, %v374
    %v392 = vadd.s32 %v388, %v375
    %v393 = vadd.s32 %v388, %v376
    %v394 = vadd.s32 %v388, %v377
    %v395 = vadd.s32 %v388, %v378
    %v396 = vadd.s32 %v388, %v379
    %v397 = vadd.s32 %v388, %v380
    %v398 = vadd.s32 %v388, %v381
    %v399 = vadd.s32 %v388, %v382
    %v400 = vadd.s32 %v388, %v383
    %v401 = vadd.s32 %v388, %v384
    %v402 = vadd.s32 %v388, %v385
    %v403 = vadd.s32 %v388, %v386
    %v404 = vadd.s32 %v388, %v387
    %s405 = smul.u32 0, 128
    %v406 = vlaneseq
    %v407 = vand.u32 %v406, 127
    %v408 = vstv %s405
    %v409 = vadd.s32 %v408, %v407
    %vm410 = vcmp.lt.s32.totalorder %v389, 8
    %vm411 = vcmp.lt.s32.totalorder %v390, 8
    %vm412 = vcmp.lt.s32.totalorder %v391, 8
    %vm413 = vcmp.lt.s32.totalorder %v392, 8
    %vm414 = vcmp.lt.s32.totalorder %v393, 8
    %vm415 = vcmp.lt.s32.totalorder %v394, 8
    %vm416 = vcmp.lt.s32.totalorder %v395, 8
    %vm417 = vcmp.lt.s32.totalorder %v396, 8
    %vm418 = vcmp.lt.s32.totalorder %v397, 8
    %vm419 = vcmp.lt.s32.totalorder %v398, 8
    %vm420 = vcmp.lt.s32.totalorder %v399, 8
    %vm421 = vcmp.lt.s32.totalorder %v400, 8
    %vm422 = vcmp.lt.s32.totalorder %v401, 8
    %vm423 = vcmp.lt.s32.totalorder %v402, 8
    %vm424 = vcmp.lt.s32.totalorder %v403, 8
    %vm425 = vcmp.lt.s32.totalorder %v404, 8
    %vm426 = vcmp.lt.s32.totalorder %v409, 8
    %v427 = vsel %vm410, 1, 0
    %v428 = vsel %vm411, 1, 0
    %v429 = vsel %vm412, 1, 0
    %v430 = vsel %vm413, 1, 0
    %v431 = vsel %vm414, 1, 0
    %v432 = vsel %vm415, 1, 0
    %v433 = vsel %vm416, 1, 0
    %v434 = vsel %vm417, 1, 0
    %v435 = vsel %vm418, 1, 0
    %v436 = vsel %vm419, 1, 0
    %v437 = vsel %vm420, 1, 0
    %v438 = vsel %vm421, 1, 0
    %v439 = vsel %vm422, 1, 0
    %v440 = vsel %vm423, 1, 0
    %v441 = vsel %vm424, 1, 0
    %v442 = vsel %vm425, 1, 0
    %vm443 = vcmp.eq.s32.totalorder %v427, 1
    %vm444 = vcmp.eq.s32.totalorder %v428, 1
    %vm445 = vcmp.eq.s32.totalorder %v429, 1
    %vm446 = vcmp.eq.s32.totalorder %v430, 1
    %vm447 = vcmp.eq.s32.totalorder %v431, 1
    %vm448 = vcmp.eq.s32.totalorder %v432, 1
    %vm449 = vcmp.eq.s32.totalorder %v433, 1
    %vm450 = vcmp.eq.s32.totalorder %v434, 1
    %vm451 = vcmp.eq.s32.totalorder %v435, 1
    %vm452 = vcmp.eq.s32.totalorder %v436, 1
    %vm453 = vcmp.eq.s32.totalorder %v437, 1
    %vm454 = vcmp.eq.s32.totalorder %v438, 1
    %vm455 = vcmp.eq.s32.totalorder %v439, 1
    %vm456 = vcmp.eq.s32.totalorder %v440, 1
    %vm457 = vcmp.eq.s32.totalorder %v441, 1
    %vm458 = vcmp.eq.s32.totalorder %v442, 1
    %v459 = vsel %vm426, 1, 0
    %vm460 = vcmp.eq.s32.totalorder %v459, 1
    %vm461 = vmand %vm443, %vm460
    %vm462 = vmand %vm444, %vm460
    %vm463 = vmand %vm445, %vm460
    %vm464 = vmand %vm446, %vm460
    %vm465 = vmand %vm447, %vm460
    %vm466 = vmand %vm448, %vm460
    %vm467 = vmand %vm449, %vm460
    %vm468 = vmand %vm450, %vm460
    %vm469 = vmand %vm451, %vm460
    %vm470 = vmand %vm452, %vm460
    %vm471 = vmand %vm453, %vm460
    %vm472 = vmand %vm454, %vm460
    %vm473 = vmand %vm455, %vm460
    %vm474 = vmand %vm456, %vm460
    %vm475 = vmand %vm457, %vm460
    %vm476 = vmand %vm458, %vm460
    %v477 = vsel %vm461, %v292, -1e+30
    %v478 = vsel %vm462, %v297, -1e+30
    %v479 = vsel %vm463, %v302, -1e+30
    %v480 = vsel %vm464, %v307, -1e+30
    %v481 = vsel %vm465, %v312, -1e+30
    %v482 = vsel %vm466, %v317, -1e+30
    %v483 = vsel %vm467, %v322, -1e+30
    %v484 = vsel %vm468, %v327, -1e+30
    %v485 = vsel %vm469, %v332, -1e+30
    %v486 = vsel %vm470, %v337, -1e+30
    %v487 = vsel %vm471, %v342, -1e+30
    %v488 = vsel %vm472, %v347, -1e+30
    %v489 = vsel %vm473, %v352, -1e+30
    %v490 = vsel %vm474, %v357, -1e+30
    %v491 = vsel %vm475, %v362, -1e+30
    %v492 = vsel %vm476, %v367, -1e+30
    %v493 = vld [vmem:[#allocation2] sm:$0xff]
    %v494 = vld [vmem:[#allocation2 + $0x8] sm:$0xff]
    %v495 = vld [vmem:[#allocation2 + $0x10] sm:$0xff]
    %v496 = vld [vmem:[#allocation2 + $0x18] sm:$0xff]
    %v497 = vld [vmem:[#allocation2 + $0x20] sm:$0xff]
    %v498 = vld [vmem:[#allocation2 + $0x28] sm:$0xff]
    %v499 = vld [vmem:[#allocation2 + $0x30] sm:$0xff]
    %v500 = vld [vmem:[#allocation2 + $0x38] sm:$0xff]
    %v501 = vld [vmem:[#allocation2 + $0x40] sm:$0xff]
    %v502 = vld [vmem:[#allocation2 + $0x48] sm:$0xff]
    %v503 = vld [vmem:[#allocation2 + $0x50] sm:$0xff]
    %v504 = vld [vmem:[#allocation2 + $0x58] sm:$0xff]
    %v505 = vld [vmem:[#allocation2 + $0x60] sm:$0xff]
    %v506 = vld [vmem:[#allocation2 + $0x68] sm:$0xff]
    %v507 = vld [vmem:[#allocation2 + $0x70] sm:$0xff]
    %v508 = vld [vmem:[#allocation2 + $0x78] sm:$0xff]
    %509 = vmax.xlane.f32.xlu0 %v477
    %v510 = vpop.xlane.xlu0 %509
    %511 = vmax.xlane.f32.xlu0 %v478
    %v512 = vpop.xlane.xlu0 %511
    %513 = vmax.xlane.f32.xlu0 %v479
    %v514 = vpop.xlane.xlu0 %513
    %515 = vmax.xlane.f32.xlu0 %v480
    %v516 = vpop.xlane.xlu0 %515
    %517 = vmax.xlane.f32.xlu0 %v481
    %v518 = vpop.xlane.xlu0 %517
    %519 = vmax.xlane.f32.xlu0 %v482
    %v520 = vpop.xlane.xlu0 %519
    %521 = vmax.xlane.f32.xlu0 %v483
    %v522 = vpop.xlane.xlu0 %521
    %523 = vmax.xlane.f32.xlu0 %v484
    %v524 = vpop.xlane.xlu0 %523
    %525 = vmax.xlane.f32.xlu0 %v485
    %v526 = vpop.xlane.xlu0 %525
    %527 = vmax.xlane.f32.xlu0 %v486
    %v528 = vpop.xlane.xlu0 %527
    %529 = vmax.xlane.f32.xlu0 %v487
    %v530 = vpop.xlane.xlu0 %529
    %531 = vmax.xlane.f32.xlu0 %v488
    %v532 = vpop.xlane.xlu0 %531
    %533 = vmax.xlane.f32.xlu0 %v489
    %v534 = vpop.xlane.xlu0 %533
    %535 = vmax.xlane.f32.xlu0 %v490
    %v536 = vpop.xlane.xlu0 %535
    %537 = vmax.xlane.f32.xlu0 %v491
    %v538 = vpop.xlane.xlu0 %537
    %539 = vmax.xlane.f32.xlu0 %v492
    %v540 = vpop.xlane.xlu0 %539
    %v541 = vmax.f32 %v493, %v510
    %v542 = vmax.f32 %v494, %v512
    %v543 = vmax.f32 %v495, %v514
    %v544 = vmax.f32 %v496, %v516
    %v545 = vmax.f32 %v497, %v518
    %v546 = vmax.f32 %v498, %v520
    %v547 = vmax.f32 %v499, %v522
    %v548 = vmax.f32 %v500, %v524
    %v549 = vmax.f32 %v501, %v526
    %v550 = vmax.f32 %v502, %v528
    %v551 = vmax.f32 %v503, %v530
    %v552 = vmax.f32 %v504, %v532
    %v553 = vmax.f32 %v505, %v534
    %v554 = vmax.f32 %v506, %v536
    %v555 = vmax.f32 %v507, %v538
    %v556 = vmax.f32 %v508, %v540
    %558 = vset.pattern.permute.xlu0 0
    %559 = vperm.xlu0 %558, %v541
    %v560 = vpop.permute.xlu0 %559
    %563 = vset.pattern.permute.xlu0 0
    %564 = vperm.xlu0 %563, %v542
    %v565 = vpop.permute.xlu0 %564
    %568 = vset.pattern.permute.xlu0 0
    %569 = vperm.xlu0 %568, %v543
    %v570 = vpop.permute.xlu0 %569
    %573 = vset.pattern.permute.xlu0 0
    %574 = vperm.xlu0 %573, %v544
    %v575 = vpop.permute.xlu0 %574
    %578 = vset.pattern.permute.xlu0 0
    %579 = vperm.xlu0 %578, %v545
    %v580 = vpop.permute.xlu0 %579
    %583 = vset.pattern.permute.xlu0 0
    %584 = vperm.xlu0 %583, %v546
    %v585 = vpop.permute.xlu0 %584
    %588 = vset.pattern.permute.xlu0 0
    %589 = vperm.xlu0 %588, %v547
    %v590 = vpop.permute.xlu0 %589
    %593 = vset.pattern.permute.xlu0 0
    %594 = vperm.xlu0 %593, %v548
    %v595 = vpop.permute.xlu0 %594
    %598 = vset.pattern.permute.xlu0 0
    %599 = vperm.xlu0 %598, %v549
    %v600 = vpop.permute.xlu0 %599
    %603 = vset.pattern.permute.xlu0 0
    %604 = vperm.xlu0 %603, %v550
    %v605 = vpop.permute.xlu0 %604
    %608 = vset.pattern.permute.xlu0 0
    %609 = vperm.xlu0 %608, %v551
    %v610 = vpop.permute.xlu0 %609
    %613 = vset.pattern.permute.xlu0 0
    %614 = vperm.xlu0 %613, %v552
    %v615 = vpop.permute.xlu0 %614
    %618 = vset.pattern.permute.xlu0 0
    %619 = vperm.xlu0 %618, %v553
    %v620 = vpop.permute.xlu0 %619
    %623 = vset.pattern.permute.xlu0 0
    %624 = vperm.xlu0 %623, %v554
    %v625 = vpop.permute.xlu0 %624
    %628 = vset.pattern.permute.xlu0 0
    %629 = vperm.xlu0 %628, %v555
    %v630 = vpop.permute.xlu0 %629
    %633 = vset.pattern.permute.xlu0 0
    %634 = vperm.xlu0 %633, %v556
    %v635 = vpop.permute.xlu0 %634
    %v637 = vsub.f32 %v477, %v560
    %v638 = vsub.f32 %v478, %v565
    %v639 = vsub.f32 %v479, %v570
    %v640 = vsub.f32 %v480, %v575
    %v641 = vsub.f32 %v481, %v580
    %v642 = vsub.f32 %v482, %v585
    %v643 = vsub.f32 %v483, %v590
    %v644 = vsub.f32 %v484, %v595
    %v645 = vsub.f32 %v485, %v600
    %v646 = vsub.f32 %v486, %v605
    %v647 = vsub.f32 %v487, %v610
    %v648 = vsub.f32 %v488, %v615
    %v649 = vsub.f32 %v489, %v620
    %v650 = vsub.f32 %v490, %v625
    %v651 = vsub.f32 %v491, %v630
    %v652 = vsub.f32 %v492, %v635
    %v653 = vmul.f32 %v637, 1.442695
    %v654 = vpow.pop %v653
    %v655 = vmul.f32 %v638, 1.442695
    %v656 = vpow.pop %v655
    %v657 = vmul.f32 %v639, 1.442695
    %v658 = vpow.pop %v657
    %v659 = vmul.f32 %v640, 1.442695
    %v660 = vpow.pop %v659
    %v661 = vmul.f32 %v641, 1.442695
    %v662 = vpow.pop %v661
    %v663 = vmul.f32 %v642, 1.442695
    %v664 = vpow.pop %v663
    %v665 = vmul.f32 %v643, 1.442695
    %v666 = vpow.pop %v665
    %v667 = vmul.f32 %v644, 1.442695
    %v668 = vpow.pop %v667
    %v669 = vmul.f32 %v645, 1.442695
    %v670 = vpow.pop %v669
    %v671 = vmul.f32 %v646, 1.442695
    %v672 = vpow.pop %v671
    %v673 = vmul.f32 %v647, 1.442695
    %v674 = vpow.pop %v673
    %v675 = vmul.f32 %v648, 1.442695
    %v676 = vpow.pop %v675
    %v677 = vmul.f32 %v649, 1.442695
    %v678 = vpow.pop %v677
    %v679 = vmul.f32 %v650, 1.442695
    %v680 = vpow.pop %v679
    %v681 = vmul.f32 %v651, 1.442695
    %v682 = vpow.pop %v681
    %v683 = vmul.f32 %v652, 1.442695
    %v684 = vpow.pop %v683
    %v685 = vsub.f32 %v493, %v541
    %v686 = vsub.f32 %v494, %v542
    %v687 = vsub.f32 %v495, %v543
    %v688 = vsub.f32 %v496, %v544
    %v689 = vsub.f32 %v497, %v545
    %v690 = vsub.f32 %v498, %v546
    %v691 = vsub.f32 %v499, %v547
    %v692 = vsub.f32 %v500, %v548
    %v693 = vsub.f32 %v501, %v549
    %v694 = vsub.f32 %v502, %v550
    %v695 = vsub.f32 %v503, %v551
    %v696 = vsub.f32 %v504, %v552
    %v697 = vsub.f32 %v505, %v553
    %v698 = vsub.f32 %v506, %v554
    %v699 = vsub.f32 %v507, %v555
    %v700 = vsub.f32 %v508, %v556
    %v701 = vmul.f32 %v685, 1.442695
    %v702 = vpow.pop %v701
    %v703 = vmul.f32 %v686, 1.442695
    %v704 = vpow.pop %v703
    %v705 = vmul.f32 %v687, 1.442695
    %v706 = vpow.pop %v705
    %v707 = vmul.f32 %v688, 1.442695
    %v708 = vpow.pop %v707
    %v709 = vmul.f32 %v689, 1.442695
    %v710 = vpow.pop %v709
    %v711 = vmul.f32 %v690, 1.442695
    %v712 = vpow.pop %v711
    %v713 = vmul.f32 %v691, 1.442695
    %v714 = vpow.pop %v713
    %v715 = vmul.f32 %v692, 1.442695
    %v716 = vpow.pop %v715
    %v717 = vmul.f32 %v693, 1.442695
    %v718 = vpow.pop %v717
    %v719 = vmul.f32 %v694, 1.442695
    %v720 = vpow.pop %v719
    %v721 = vmul.f32 %v695, 1.442695
    %v722 = vpow.pop %v721
    %v723 = vmul.f32 %v696, 1.442695
    %v724 = vpow.pop %v723
    %v725 = vmul.f32 %v697, 1.442695
    %v726 = vpow.pop %v725
    %v727 = vmul.f32 %v698, 1.442695
    %v728 = vpow.pop %v727
    %v729 = vmul.f32 %v699, 1.442695
    %v730 = vpow.pop %v729
    %v731 = vmul.f32 %v700, 1.442695
    %v732 = vpow.pop %v731
    %v733 = vld [vmem:[#allocation3] sm:$0xff]
    %v734 = vld [vmem:[#allocation3 + $0x8] sm:$0xff]
    %v735 = vld [vmem:[#allocation3 + $0x10] sm:$0xff]
    %v736 = vld [vmem:[#allocation3 + $0x18] sm:$0xff]
    %v737 = vld [vmem:[#allocation3 + $0x20] sm:$0xff]
    %v738 = vld [vmem:[#allocation3 + $0x28] sm:$0xff]
    %v739 = vld [vmem:[#allocation3 + $0x30] sm:$0xff]
    %v740 = vld [vmem:[#allocation3 + $0x38] sm:$0xff]
    %v741 = vld [vmem:[#allocation3 + $0x40] sm:$0xff]
    %v742 = vld [vmem:[#allocation3 + $0x48] sm:$0xff]
    %v743 = vld [vmem:[#allocation3 + $0x50] sm:$0xff]
    %v744 = vld [vmem:[#allocation3 + $0x58] sm:$0xff]
    %v745 = vld [vmem:[#allocation3 + $0x60] sm:$0xff]
    %v746 = vld [vmem:[#allocation3 + $0x68] sm:$0xff]
    %v747 = vld [vmem:[#allocation3 + $0x70] sm:$0xff]
    %v748 = vld [vmem:[#allocation3 + $0x78] sm:$0xff]
    %v749 = vmul.f32 %v702, %v733
    %v750 = vmul.f32 %v704, %v734
    %v751 = vmul.f32 %v706, %v735
    %v752 = vmul.f32 %v708, %v736
    %v753 = vmul.f32 %v710, %v737
    %v754 = vmul.f32 %v712, %v738
    %v755 = vmul.f32 %v714, %v739
    %v756 = vmul.f32 %v716, %v740
    %v757 = vmul.f32 %v718, %v741
    %v758 = vmul.f32 %v720, %v742
    %v759 = vmul.f32 %v722, %v743
    %v760 = vmul.f32 %v724, %v744
    %v761 = vmul.f32 %v726, %v745
    %v762 = vmul.f32 %v728, %v746
    %v763 = vmul.f32 %v730, %v747
    %v764 = vmul.f32 %v732, %v748
    %765 = vadd.xlane.f32.xlu0 %v654
    %v766 = vpop.xlane.xlu0 %765
    %767 = vadd.xlane.f32.xlu0 %v656
    %v768 = vpop.xlane.xlu0 %767
    %769 = vadd.xlane.f32.xlu0 %v658
    %v770 = vpop.xlane.xlu0 %769
    %771 = vadd.xlane.f32.xlu0 %v660
    %v772 = vpop.xlane.xlu0 %771
    %773 = vadd.xlane.f32.xlu0 %v662
    %v774 = vpop.xlane.xlu0 %773
    %775 = vadd.xlane.f32.xlu0 %v664
    %v776 = vpop.xlane.xlu0 %775
    %777 = vadd.xlane.f32.xlu0 %v666
    %v778 = vpop.xlane.xlu0 %777
    %779 = vadd.xlane.f32.xlu0 %v668
    %v780 = vpop.xlane.xlu0 %779
    %781 = vadd.xlane.f32.xlu0 %v670
    %v782 = vpop.xlane.xlu0 %781
    %783 = vadd.xlane.f32.xlu0 %v672
    %v784 = vpop.xlane.xlu0 %783
    %785 = vadd.xlane.f32.xlu0 %v674
    %v786 = vpop.xlane.xlu0 %785
    %787 = vadd.xlane.f32.xlu0 %v676
    %v788 = vpop.xlane.xlu0 %787
    %789 = vadd.xlane.f32.xlu0 %v678
    %v790 = vpop.xlane.xlu0 %789
    %791 = vadd.xlane.f32.xlu0 %v680
    %v792 = vpop.xlane.xlu0 %791
    %793 = vadd.xlane.f32.xlu0 %v682
    %v794 = vpop.xlane.xlu0 %793
    %795 = vadd.xlane.f32.xlu0 %v684
    %v796 = vpop.xlane.xlu0 %795
    %v797 = vadd.f32 %v749, %v766
    %v798 = vadd.f32 %v750, %v768
    %v799 = vadd.f32 %v751, %v770
    %v800 = vadd.f32 %v752, %v772
    %v801 = vadd.f32 %v753, %v774
    %v802 = vadd.f32 %v754, %v776
    %v803 = vadd.f32 %v755, %v778
    %v804 = vadd.f32 %v756, %v780
    %v805 = vadd.f32 %v757, %v782
    %v806 = vadd.f32 %v758, %v784
    %v807 = vadd.f32 %v759, %v786
    %v808 = vadd.f32 %v760, %v788
    %v809 = vadd.f32 %v761, %v790
    %v810 = vadd.f32 %v762, %v792
    %v811 = vadd.f32 %v763, %v794
    %v812 = vadd.f32 %v764, %v796
    %vm813 = vcmask 7168
    %814 = vst.msk [vmem:[#allocation3] sm:$0xff] %vm813, %v797
    %815 = vst.msk [vmem:[#allocation3 + $0x8] sm:$0xff] %vm813, %v798
    %816 = vst.msk [vmem:[#allocation3 + $0x10] sm:$0xff] %vm813, %v799
    %817 = vst.msk [vmem:[#allocation3 + $0x18] sm:$0xff] %vm813, %v800
    %818 = vst.msk [vmem:[#allocation3 + $0x20] sm:$0xff] %vm813, %v801
    %819 = vst.msk [vmem:[#allocation3 + $0x28] sm:$0xff] %vm813, %v802
    %820 = vst.msk [vmem:[#allocation3 + $0x30] sm:$0xff] %vm813, %v803
    %821 = vst.msk [vmem:[#allocation3 + $0x38] sm:$0xff] %vm813, %v804
    %822 = vst.msk [vmem:[#allocation3 + $0x40] sm:$0xff] %vm813, %v805
    %823 = vst.msk [vmem:[#allocation3 + $0x48] sm:$0xff] %vm813, %v806
    %824 = vst.msk [vmem:[#allocation3 + $0x50] sm:$0xff] %vm813, %v807
    %825 = vst.msk [vmem:[#allocation3 + $0x58] sm:$0xff] %vm813, %v808
    %826 = vst.msk [vmem:[#allocation3 + $0x60] sm:$0xff] %vm813, %v809
    %827 = vst.msk [vmem:[#allocation3 + $0x68] sm:$0xff] %vm813, %v810
    %828 = vst.msk [vmem:[#allocation3 + $0x70] sm:$0xff] %vm813, %v811
    %829 = vst.msk [vmem:[#allocation3 + $0x78] sm:$0xff] %vm813, %v812
    %830 = vst.msk [vmem:[#allocation2] sm:$0xff] %vm813, %v541
    %831 = vst.msk [vmem:[#allocation2 + $0x8] sm:$0xff] %vm813, %v542
    %832 = vst.msk [vmem:[#allocation2 + $0x10] sm:$0xff] %vm813, %v543
    %833 = vst.msk [vmem:[#allocation2 + $0x18] sm:$0xff] %vm813, %v544
    %834 = vst.msk [vmem:[#allocation2 + $0x20] sm:$0xff] %vm813, %v545
    %835 = vst.msk [vmem:[#allocation2 + $0x28] sm:$0xff] %vm813, %v546
    %836 = vst.msk [vmem:[#allocation2 + $0x30] sm:$0xff] %vm813, %v547
    %837 = vst.msk [vmem:[#allocation2 + $0x38] sm:$0xff] %vm813, %v548
    %838 = vst.msk [vmem:[#allocation2 + $0x40] sm:$0xff] %vm813, %v549
    %839 = vst.msk [vmem:[#allocation2 + $0x48] sm:$0xff] %vm813, %v550
    %840 = vst.msk [vmem:[#allocation2 + $0x50] sm:$0xff] %vm813, %v551
    %841 = vst.msk [vmem:[#allocation2 + $0x58] sm:$0xff] %vm813, %v552
    %842 = vst.msk [vmem:[#allocation2 + $0x60] sm:$0xff] %vm813, %v553
    %843 = vst.msk [vmem:[#allocation2 + $0x68] sm:$0xff] %vm813, %v554
    %844 = vst.msk [vmem:[#allocation2 + $0x70] sm:$0xff] %vm813, %v555
    %845 = vst.msk [vmem:[#allocation2 + $0x78] sm:$0xff] %vm813, %v556
    %v846 = vmax.f32 %v477, %v481
    %v847 = vmax.f32 %v478, %v482
    %v848 = vmax.f32 %v479, %v483
    %v849 = vmax.f32 %v480, %v484
    %v850 = vmax.f32 %v846, %v485
    %v851 = vmax.f32 %v847, %v486
    %v852 = vmax.f32 %v848, %v487
    %v853 = vmax.f32 %v849, %v488
    %v854 = vmax.f32 %v850, %v489
    %v855 = vmax.f32 %v851, %v490
    %v856 = vmax.f32 %v852, %v491
    %v857 = vmax.f32 %v853, %v492
    %v858 = vmax.f32 %v854, %v855
    %v859 = vmax.f32 %v856, %v857
    %v860 = vmax.f32 %v858, %v859
    %s861 = smul.u32 0, 8
    %s862 = scalar_lea.vmem [#allocation4], %s861
    %v863 = vld [vmem:[%s862] sm:$0xff]
    %v864 = vmax.f32 %v863, %v860
    %v865 = vsub.f32 %v477, %v864
    %v866 = vsub.f32 %v478, %v864
    %v867 = vsub.f32 %v479, %v864
    %v868 = vsub.f32 %v480, %v864
    %v869 = vsub.f32 %v481, %v864
    %v870 = vsub.f32 %v482, %v864
    %v871 = vsub.f32 %v483, %v864
    %v872 = vsub.f32 %v484, %v864
    %v873 = vsub.f32 %v485, %v864
    %v874 = vsub.f32 %v486, %v864
    %v875 = vsub.f32 %v487, %v864
    %v876 = vsub.f32 %v488, %v864
    %v877 = vsub.f32 %v489, %v864
    %v878 = vsub.f32 %v490, %v864
    %v879 = vsub.f32 %v491, %v864
    %v880 = vsub.f32 %v492, %v864
    %v881 = vmul.f32 %v865, 1.442695
    %v882 = vpow.pop %v881
    %v883 = vmul.f32 %v866, 1.442695
    %v884 = vpow.pop %v883
    %v885 = vmul.f32 %v867, 1.442695
    %v886 = vpow.pop %v885
    %v887 = vmul.f32 %v868, 1.442695
    %v888 = vpow.pop %v887
    %v889 = vmul.f32 %v869, 1.442695
    %v890 = vpow.pop %v889
    %v891 = vmul.f32 %v870, 1.442695
    %v892 = vpow.pop %v891
    %v893 = vmul.f32 %v871, 1.442695
    %v894 = vpow.pop %v893
    %v895 = vmul.f32 %v872, 1.442695
    %v896 = vpow.pop %v895
    %v897 = vmul.f32 %v873, 1.442695
    %v898 = vpow.pop %v897
    %v899 = vmul.f32 %v874, 1.442695
    %v900 = vpow.pop %v899
    %v901 = vmul.f32 %v875, 1.442695
    %v902 = vpow.pop %v901
    %v903 = vmul.f32 %v876, 1.442695
    %v904 = vpow.pop %v903
    %v905 = vmul.f32 %v877, 1.442695
    %v906 = vpow.pop %v905
    %v907 = vmul.f32 %v878, 1.442695
    %v908 = vpow.pop %v907
    %v909 = vmul.f32 %v879, 1.442695
    %v910 = vpow.pop %v909
    %v911 = vmul.f32 %v880, 1.442695
    %v912 = vpow.pop %v911
    %v913 = vsub.f32 %v863, %v864
    %v914 = vmul.f32 %v913, 1.442695
    %v915 = vpow.pop %v914
    %s916 = scalar_lea.vmem [#allocation5], %s861
    %v917 = vld [vmem:[%s916] sm:$0xff]
    %v918 = vmul.f32 %v915, %v917
    %v919 = vadd.f32 %v882, %v884
    %v920 = vadd.f32 %v919, %v886
    %v921 = vadd.f32 %v920, %v888
    %v922 = vadd.f32 %v921, %v890
    %v923 = vadd.f32 %v922, %v892
    %v924 = vadd.f32 %v923, %v894
    %v925 = vadd.f32 %v924, %v896
    %v926 = vadd.f32 %v925, %v898
    %v927 = vadd.f32 %v926, %v900
    %v928 = vadd.f32 %v927, %v902
    %v929 = vadd.f32 %v928, %v904
    %v930 = vadd.f32 %v929, %v906
    %v931 = vadd.f32 %v930, %v908
    %v932 = vadd.f32 %v931, %v910
    %v933 = vadd.f32 %v932, %v912
    %v934 = vadd.f32 %v918, %v933
    %935 = vst [vmem:[%s916] sm:$0xff] %v934
    %936 = vst [vmem:[%s862] sm:$0xff] %v864
    %p937 = scmp.eq.s32.totalorder 0, 0
    // Predicated region
    $region22: #{tpu_custom_call.1} parent=1 // pred_check
      %p938 = pneg %p937
    $region23: #{tpu_custom_call.1} parent=1 // pred_check_branch
      %940 = sbr.rel (%p938) target = $region25
    $region24: #{tpu_custom_call.1} parent=1 // pred_region
      %v941 = vmul.f32 %v96, %v112
      %v942 = vmul.f32 %v97, %v113
      %v943 = vmul.f32 %v98, %v114
      %v944 = vmul.f32 %v99, %v115
      %v945 = vmul.f32 %v100, %v116
      %v946 = vmul.f32 %v101, %v117
      %v947 = vmul.f32 %v102, %v118
      %v948 = vmul.f32 %v103, %v119
      %v949 = vmul.f32 %v104, %v120
      %v950 = vmul.f32 %v105, %v121
      %v951 = vmul.f32 %v106, %v122
      %v952 = vmul.f32 %v107, %v123
      %v953 = vmul.f32 %v108, %v124
      %v954 = vmul.f32 %v109, %v125
      %v955 = vmul.f32 %v110, %v126
      %v956 = vmul.f32 %v111, %v127
      %v957 = vsel %vm128, %v941, 0.0
      %958 = vadd.xlane.f32.xlu0 %v957
      %v959 = vpop.xlane.xlu0 %958
      %v960 = vsel %vm128, %v942, 0.0
      %961 = vadd.xlane.f32.xlu0 %v960
      %v962 = vpop.xlane.xlu0 %961
      %v963 = vsel %vm128, %v943, 0.0
      %964 = vadd.xlane.f32.xlu0 %v963
      %v965 = vpop.xlane.xlu0 %964
      %v966 = vsel %vm128, %v944, 0.0
      %967 = vadd.xlane.f32.xlu0 %v966
      %v968 = vpop.xlane.xlu0 %967
      %v969 = vsel %vm128, %v945, 0.0
      %970 = vadd.xlane.f32.xlu0 %v969
      %v971 = vpop.xlane.xlu0 %970
      %v972 = vsel %vm128, %v946, 0.0
      %973 = vadd.xlane.f32.xlu0 %v972
      %v974 = vpop.xlane.xlu0 %973
      %v975 = vsel %vm128, %v947, 0.0
      %976 = vadd.xlane.f32.xlu0 %v975
      %v977 = vpop.xlane.xlu0 %976
      %v978 = vsel %vm128, %v948, 0.0
      %979 = vadd.xlane.f32.xlu0 %v978
      %v980 = vpop.xlane.xlu0 %979
      %v981 = vsel %vm128, %v949, 0.0
      %982 = vadd.xlane.f32.xlu0 %v981
      %v983 = vpop.xlane.xlu0 %982
      %v984 = vsel %vm128, %v950, 0.0
      %985 = vadd.xlane.f32.xlu0 %v984
      %v986 = vpop.xlane.xlu0 %985
      %v987 = vsel %vm128, %v951, 0.0
      %988 = vadd.xlane.f32.xlu0 %v987
      %v989 = vpop.xlane.xlu0 %988
      %v990 = vsel %vm128, %v952, 0.0
      %991 = vadd.xlane.f32.xlu0 %v990
      %v992 = vpop.xlane.xlu0 %991
      %v993 = vsel %vm128, %v953, 0.0
      %994 = vadd.xlane.f32.xlu0 %v993
      %v995 = vpop.xlane.xlu0 %994
      %v996 = vsel %vm128, %v954, 0.0
      %997 = vadd.xlane.f32.xlu0 %v996
      %v998 = vpop.xlane.xlu0 %997
      %v999 = vsel %vm128, %v955, 0.0
      %1000 = vadd.xlane.f32.xlu0 %v999
      %v1001 = vpop.xlane.xlu0 %1000
      %v1002 = vsel %vm128, %v956, 0.0
      %1003 = vadd.xlane.f32.xlu0 %v1002
      %v1004 = vpop.xlane.xlu0 %1003
      %v1005 = vld [vmem:[#allocation8] sm:$0xff]
      %v1006 = vld [vmem:[#allocation8 + $0x8] sm:$0xff]
      %v1007 = vld [vmem:[#allocation8 + $0x10] sm:$0xff]
      %v1008 = vld [vmem:[#allocation8 + $0x18] sm:$0xff]
      %v1009 = vld [vmem:[#allocation8 + $0x20] sm:$0xff]
      %v1010 = vld [vmem:[#allocation8 + $0x28] sm:$0xff]
      %v1011 = vld [vmem:[#allocation8 + $0x30] sm:$0xff]
      %v1012 = vld [vmem:[#allocation8 + $0x38] sm:$0xff]
      %v1013 = vld [vmem:[#allocation8 + $0x40] sm:$0xff]
      %v1014 = vld [vmem:[#allocation8 + $0x48] sm:$0xff]
      %v1015 = vld [vmem:[#allocation8 + $0x50] sm:$0xff]
      %v1016 = vld [vmem:[#allocation8 + $0x58] sm:$0xff]
      %v1017 = vld [vmem:[#allocation8 + $0x60] sm:$0xff]
      %v1018 = vld [vmem:[#allocation8 + $0x68] sm:$0xff]
      %v1019 = vld [vmem:[#allocation8 + $0x70] sm:$0xff]
      %v1020 = vld [vmem:[#allocation8 + $0x78] sm:$0xff]
      %v1021 = vsel %vm410, %v959, 0.0
      %v1022 = vsel %vm411, %v962, 0.0
      %v1023 = vsel %vm412, %v965, 0.0
      %v1024 = vsel %vm413, %v968, 0.0
      %v1025 = vsel %vm414, %v971, 0.0
      %v1026 = vsel %vm415, %v974, 0.0
      %v1027 = vsel %vm416, %v977, 0.0
      %v1028 = vsel %vm417, %v980, 0.0
      %v1029 = vsel %vm418, %v983, 0.0
      %v1030 = vsel %vm419, %v986, 0.0
      %v1031 = vsel %vm420, %v989, 0.0
      %v1032 = vsel %vm421, %v992, 0.0
      %v1033 = vsel %vm422, %v995, 0.0
      %v1034 = vsel %vm423, %v998, 0.0
      %v1035 = vsel %vm424, %v1001, 0.0
      %v1036 = vsel %vm425, %v1004, 0.0
      %v1037 = vadd.f32 %v1005, %v1021
      %v1038 = vadd.f32 %v1006, %v1022
      %v1039 = vadd.f32 %v1007, %v1023
      %v1040 = vadd.f32 %v1008, %v1024
      %v1041 = vadd.f32 %v1009, %v1025
      %v1042 = vadd.f32 %v1010, %v1026
      %v1043 = vadd.f32 %v1011, %v1027
      %v1044 = vadd.f32 %v1012, %v1028
      %v1045 = vadd.f32 %v1013, %v1029
      %v1046 = vadd.f32 %v1014, %v1030
      %v1047 = vadd.f32 %v1015, %v1031
      %v1048 = vadd.f32 %v1016, %v1032
      %v1049 = vadd.f32 %v1017, %v1033
      %v1050 = vadd.f32 %v1018, %v1034
      %v1051 = vadd.f32 %v1019, %v1035
      %v1052 = vadd.f32 %v1020, %v1036
      %1053 = vst.msk [vmem:[#allocation8] sm:$0xff] %vm813, %v1037
      %1054 = vst.msk [vmem:[#allocation8 + $0x8] sm:$0xff] %vm813, %v1038
      %1055 = vst.msk [vmem:[#allocation8 + $0x10] sm:$0xff] %vm813, %v1039
      %1056 = vst.msk [vmem:[#allocation8 + $0x18] sm:$0xff] %vm813, %v1040
      %1057 = vst.msk [vmem:[#allocation8 + $0x20] sm:$0xff] %vm813, %v1041
      %1058 = vst.msk [vmem:[#allocation8 + $0x28] sm:$0xff] %vm813, %v1042
      %1059 = vst.msk [vmem:[#allocation8 + $0x30] sm:$0xff] %vm813, %v1043
      %1060 = vst.msk [vmem:[#allocation8 + $0x38] sm:$0xff] %vm813, %v1044
      %1061 = vst.msk [vmem:[#allocation8 + $0x40] sm:$0xff] %vm813, %v1045
      %1062 = vst.msk [vmem:[#allocation8 + $0x48] sm:$0xff] %vm813, %v1046
      %1063 = vst.msk [vmem:[#allocation8 + $0x50] sm:$0xff] %vm813, %v1047
      %1064 = vst.msk [vmem:[#allocation8 + $0x58] sm:$0xff] %vm813, %v1048
      %1065 = vst.msk [vmem:[#allocation8 + $0x60] sm:$0xff] %vm813, %v1049
      %1066 = vst.msk [vmem:[#allocation8 + $0x68] sm:$0xff] %vm813, %v1050
      %1067 = vst.msk [vmem:[#allocation8 + $0x70] sm:$0xff] %vm813, %v1051
      %1068 = vst.msk [vmem:[#allocation8 + $0x78] sm:$0xff] %vm813, %v1052
    $region25: #{tpu_custom_call.1} parent=1 // pred_fallthru
      _
    // Predicated region
    $region26: #{tpu_custom_call.1} parent=1 // pred_check
      %p1069 = pneg %p13
    $region27: #{tpu_custom_call.1} parent=1 // pred_check_branch
      %1071 = sbr.rel (%p1069) target = $region29
    $region28: #{tpu_custom_call.1} parent=1 // pred_region
      %v1072 = vld [vmem:[#allocation2] sm:$0xff]
      %v1073 = vld [vmem:[#allocation2 + $0x8] sm:$0xff]
      %v1074 = vld [vmem:[#allocation2 + $0x10] sm:$0xff]
      %v1075 = vld [vmem:[#allocation2 + $0x18] sm:$0xff]
      %v1076 = vld [vmem:[#allocation2 + $0x20] sm:$0xff]
      %v1077 = vld [vmem:[#allocation2 + $0x28] sm:$0xff]
      %v1078 = vld [vmem:[#allocation2 + $0x30] sm:$0xff]
      %v1079 = vld [vmem:[#allocation2 + $0x38] sm:$0xff]
      %v1080 = vld [vmem:[#allocation2 + $0x40] sm:$0xff]
      %v1081 = vld [vmem:[#allocation2 + $0x48] sm:$0xff]
      %v1082 = vld [vmem:[#allocation2 + $0x50] sm:$0xff]
      %v1083 = vld [vmem:[#allocation2 + $0x58] sm:$0xff]
      %v1084 = vld [vmem:[#allocation2 + $0x60] sm:$0xff]
      %v1085 = vld [vmem:[#allocation2 + $0x68] sm:$0xff]
      %v1086 = vld [vmem:[#allocation2 + $0x70] sm:$0xff]
      %v1087 = vld [vmem:[#allocation2 + $0x78] sm:$0xff]
      %v1088 = vld [vmem:[#allocation3] sm:$0xff]
      %v1089 = vld [vmem:[#allocation3 + $0x8] sm:$0xff]
      %v1090 = vld [vmem:[#allocation3 + $0x10] sm:$0xff]
      %v1091 = vld [vmem:[#allocation3 + $0x18] sm:$0xff]
      %v1092 = vld [vmem:[#allocation3 + $0x20] sm:$0xff]
      %v1093 = vld [vmem:[#allocation3 + $0x28] sm:$0xff]
      %v1094 = vld [vmem:[#allocation3 + $0x30] sm:$0xff]
      %v1095 = vld [vmem:[#allocation3 + $0x38] sm:$0xff]
      %v1096 = vld [vmem:[#allocation3 + $0x40] sm:$0xff]
      %v1097 = vld [vmem:[#allocation3 + $0x48] sm:$0xff]
      %v1098 = vld [vmem:[#allocation3 + $0x50] sm:$0xff]
      %v1099 = vld [vmem:[#allocation3 + $0x58] sm:$0xff]
      %v1100 = vld [vmem:[#allocation3 + $0x60] sm:$0xff]
      %v1101 = vld [vmem:[#allocation3 + $0x68] sm:$0xff]
      %v1102 = vld [vmem:[#allocation3 + $0x70] sm:$0xff]
      %v1103 = vld [vmem:[#allocation3 + $0x78] sm:$0xff]
      %v1104 = vlog2.pop %v1088
      %v1105 = vmul.f32 %v1104, 0.6931472
      %v1106 = vlog2.pop %v1089
      %v1107 = vmul.f32 %v1106, 0.6931472
      %v1108 = vlog2.pop %v1090
      %v1109 = vmul.f32 %v1108, 0.6931472
      %v1110 = vlog2.pop %v1091
      %v1111 = vmul.f32 %v1110, 0.6931472
      %v1112 = vlog2.pop %v1092
      %v1113 = vmul.f32 %v1112, 0.6931472
      %v1114 = vlog2.pop %v1093
      %v1115 = vmul.f32 %v1114, 0.6931472
      %v1116 = vlog2.pop %v1094
      %v1117 = vmul.f32 %v1116, 0.6931472
      %v1118 = vlog2.pop %v1095
      %v1119 = vmul.f32 %v1118, 0.6931472
      %v1120 = vlog2.pop %v1096
      %v1121 = vmul.f32 %v1120, 0.6931472
      %v1122 = vlog2.pop %v1097
      %v1123 = vmul.f32 %v1122, 0.6931472
      %v1124 = vlog2.pop %v1098
      %v1125 = vmul.f32 %v1124, 0.6931472
      %v1126 = vlog2.pop %v1099
      %v1127 = vmul.f32 %v1126, 0.6931472
      %v1128 = vlog2.pop %v1100
      %v1129 = vmul.f32 %v1128, 0.6931472
      %v1130 = vlog2.pop %v1101
      %v1131 = vmul.f32 %v1130, 0.6931472
      %v1132 = vlog2.pop %v1102
      %v1133 = vmul.f32 %v1132, 0.6931472
      %v1134 = vlog2.pop %v1103
      %v1135 = vmul.f32 %v1134, 0.6931472
      %v1136 = vadd.f32 %v1072, %v1105
      %v1137 = vadd.f32 %v1073, %v1107
      %v1138 = vadd.f32 %v1074, %v1109
      %v1139 = vadd.f32 %v1075, %v1111
      %v1140 = vadd.f32 %v1076, %v1113
      %v1141 = vadd.f32 %v1077, %v1115
      %v1142 = vadd.f32 %v1078, %v1117
      %v1143 = vadd.f32 %v1079, %v1119
      %v1144 = vadd.f32 %v1080, %v1121
      %v1145 = vadd.f32 %v1081, %v1123
      %v1146 = vadd.f32 %v1082, %v1125
      %v1147 = vadd.f32 %v1083, %v1127
      %v1148 = vadd.f32 %v1084, %v1129
      %v1149 = vadd.f32 %v1085, %v1131
      %v1150 = vadd.f32 %v1086, %v1133
      %v1151 = vadd.f32 %v1087, %v1135
      %v1152 = vld [vmem:[#allocation6] sm:$0xff]
      %v1153 = vld [vmem:[#allocation6 + $0x8] sm:$0xff]
      %v1154 = vld [vmem:[#allocation6 + $0x10] sm:$0xff]
      %v1155 = vld [vmem:[#allocation6 + $0x18] sm:$0xff]
      %v1156 = vld [vmem:[#allocation6 + $0x20] sm:$0xff]
      %v1157 = vld [vmem:[#allocation6 + $0x28] sm:$0xff]
      %v1158 = vld [vmem:[#allocation6 + $0x30] sm:$0xff]
      %v1159 = vld [vmem:[#allocation6 + $0x38] sm:$0xff]
      %v1160 = vld [vmem:[#allocation6 + $0x40] sm:$0xff]
      %v1161 = vld [vmem:[#allocation6 + $0x48] sm:$0xff]
      %v1162 = vld [vmem:[#allocation6 + $0x50] sm:$0xff]
      %v1163 = vld [vmem:[#allocation6 + $0x58] sm:$0xff]
      %v1164 = vld [vmem:[#allocation6 + $0x60] sm:$0xff]
      %v1165 = vld [vmem:[#allocation6 + $0x68] sm:$0xff]
      %v1166 = vld [vmem:[#allocation6 + $0x70] sm:$0xff]
      %v1167 = vld [vmem:[#allocation6 + $0x78] sm:$0xff]
      %v1168 = vsel %vm410, %v1136, 0.0
      %v1169 = vsel %vm411, %v1137, 0.0
      %v1170 = vsel %vm412, %v1138, 0.0
      %v1171 = vsel %vm413, %v1139, 0.0
      %v1172 = vsel %vm414, %v1140, 0.0
      %v1173 = vsel %vm415, %v1141, 0.0
      %v1174 = vsel %vm416, %v1142, 0.0
      %v1175 = vsel %vm417, %v1143, 0.0
      %v1176 = vsel %vm418, %v1144, 0.0
      %v1177 = vsel %vm419, %v1145, 0.0
      %v1178 = vsel %vm420, %v1146, 0.0
      %v1179 = vsel %vm421, %v1147, 0.0
      %v1180 = vsel %vm422, %v1148, 0.0
      %v1181 = vsel %vm423, %v1149, 0.0
      %v1182 = vsel %vm424, %v1150, 0.0
      %v1183 = vsel %vm425, %v1151, 0.0
      %v1184 = vadd.f32 %v1152, %v1168
      %v1185 = vadd.f32 %v1153, %v1169
      %v1186 = vadd.f32 %v1154, %v1170
      %v1187 = vadd.f32 %v1155, %v1171
      %v1188 = vadd.f32 %v1156, %v1172
      %v1189 = vadd.f32 %v1157, %v1173
      %v1190 = vadd.f32 %v1158, %v1174
      %v1191 = vadd.f32 %v1159, %v1175
      %v1192 = vadd.f32 %v1160, %v1176
      %v1193 = vadd.f32 %v1161, %v1177
      %v1194 = vadd.f32 %v1162, %v1178
      %v1195 = vadd.f32 %v1163, %v1179
      %v1196 = vadd.f32 %v1164, %v1180
      %v1197 = vadd.f32 %v1165, %v1181
      %v1198 = vadd.f32 %v1166, %v1182
      %v1199 = vadd.f32 %v1167, %v1183
      %1200 = vst.msk [vmem:[#allocation6] sm:$0xff] %vm813, %v1184
      %1201 = vst.msk [vmem:[#allocation6 + $0x8] sm:$0xff] %vm813, %v1185
      %1202 = vst.msk [vmem:[#allocation6 + $0x10] sm:$0xff] %vm813, %v1186
      %1203 = vst.msk [vmem:[#allocation6 + $0x18] sm:$0xff] %vm813, %v1187
      %1204 = vst.msk [vmem:[#allocation6 + $0x20] sm:$0xff] %vm813, %v1188
      %1205 = vst.msk [vmem:[#allocation6 + $0x28] sm:$0xff] %vm813, %v1189
      %1206 = vst.msk [vmem:[#allocation6 + $0x30] sm:$0xff] %vm813, %v1190
      %1207 = vst.msk [vmem:[#allocation6 + $0x38] sm:$0xff] %vm813, %v1191
      %1208 = vst.msk [vmem:[#allocation6 + $0x40] sm:$0xff] %vm813, %v1192
      %1209 = vst.msk [vmem:[#allocation6 + $0x48] sm:$0xff] %vm813, %v1193
      %1210 = vst.msk [vmem:[#allocation6 + $0x50] sm:$0xff] %vm813, %v1194
      %1211 = vst.msk [vmem:[#allocation6 + $0x58] sm:$0xff] %vm813, %v1195
      %1212 = vst.msk [vmem:[#allocation6 + $0x60] sm:$0xff] %vm813, %v1196
      %1213 = vst.msk [vmem:[#allocation6 + $0x68] sm:$0xff] %vm813, %v1197
      %1214 = vst.msk [vmem:[#allocation6 + $0x70] sm:$0xff] %vm813, %v1198
      %1215 = vst.msk [vmem:[#allocation6 + $0x78] sm:$0xff] %vm813, %v1199
    $region29: #{tpu_custom_call.1} parent=1 // pred_fallthru
      _
    // Predicated region
    $region30: #{tpu_custom_call.1} parent=1 // pred_check
      %p1216 = pneg %p12
    $region31: #{tpu_custom_call.1} parent=1 // pred_check_branch
      %1218 = sbr.rel (%p1216) target = $region33
    $region32: #{tpu_custom_call.1} parent=1 // pred_region
      %v1219 = vld [vmem:[%s862] sm:$0xff]
      %v1220 = vld [vmem:[%s916] sm:$0xff]
      %v1221 = vrot.slane %v1219, 4
      %v1222 = vmax.f32 %v1219, %v1221
      %v1223 = vrot.slane %v1222, 2
      %v1224 = vmax.f32 %v1222, %v1223
      %v1225 = vrot.slane %v1224, 1
      %v1226 = vmax.f32 %v1224, %v1225
      %v1227 = vsub.f32 %v1219, %v1226
      %v1228 = vmul.f32 %v1227, 1.442695
      %v1229 = vpow.pop %v1228
      %v1230 = vmul.f32 %v1220, %v1229
      %v1231 = vrot.slane %v1230, 4
      %v1232 = vadd.f32 %v1230, %v1231
      %v1233 = vrot.slane %v1232, 2
      %v1234 = vadd.f32 %v1232, %v1233
      %v1235 = vrot.slane %v1234, 1
      %v1236 = vadd.f32 %v1234, %v1235
      %v1237 = vlog2.pop %v1236
      %v1238 = vmul.f32 %v1237, 0.6931472
      %v1239 = vadd.f32 %v1226, %v1238
      %v1240 = vld [vmem:[#allocation7] sm:$0x1]
      %v1241 = vsel %vm426, %v1239, 0.0
      %v1242 = vadd.f32 %v1240, %v1241
      %1243 = vst [vmem:[#allocation7] sm:$0x1] %v1242
    $region33: #{tpu_custom_call.1} parent=1 // pred_fallthru
      _
    // Predicated region
    $region34: #{tpu_custom_call.1} parent=1 // pred_check
      _
    $region35: #{tpu_custom_call.1} parent=1 // pred_check_branch
      %1245 = sbr.rel (%p14) target = $region37
    $region36: #{tpu_custom_call.1} parent=1 // pred_region
      %v1246 = vld [vmem:[#allocation6] sm:$0xff]
      %v1247 = vld [vmem:[#allocation6 + $0x8] sm:$0xff]
      %v1248 = vld [vmem:[#allocation6 + $0x10] sm:$0xff]
      %v1249 = vld [vmem:[#allocation6 + $0x18] sm:$0xff]
      %v1250 = vld [vmem:[#allocation6 + $0x20] sm:$0xff]
      %v1251 = vld [vmem:[#allocation6 + $0x28] sm:$0xff]
      %v1252 = vld [vmem:[#allocation6 + $0x30] sm:$0xff]
      %v1253 = vld [vmem:[#allocation6 + $0x38] sm:$0xff]
      %v1254 = vld [vmem:[#allocation6 + $0x40] sm:$0xff]
      %v1255 = vld [vmem:[#allocation6 + $0x48] sm:$0xff]
      %v1256 = vld [vmem:[#allocation6 + $0x50] sm:$0xff]
      %v1257 = vld [vmem:[#allocation6 + $0x58] sm:$0xff]
      %v1258 = vld [vmem:[#allocation6 + $0x60] sm:$0xff]
      %v1259 = vld [vmem:[#allocation6 + $0x68] sm:$0xff]
      %v1260 = vld [vmem:[#allocation6 + $0x70] sm:$0xff]
      %v1261 = vld [vmem:[#allocation6 + $0x78] sm:$0xff]
      %v1262 = vsel %vm813, %v1246, 0.0
      %v1263 = vsel %vm813, %v1247, 0.0
      %v1264 = vadd.f32 %v1262, %v1263
      %v1265 = vsel %vm813, %v1248, 0.0
      %v1266 = vadd.f32 %v1264, %v1265
      %v1267 = vsel %vm813, %v1249, 0.0
      %v1268 = vadd.f32 %v1266, %v1267
      %v1269 = vsel %vm813, %v1250, 0.0
      %v1270 = vadd.f32 %v1268, %v1269
      %v1271 = vsel %vm813, %v1251, 0.0
      %v1272 = vadd.f32 %v1270, %v1271
      %v1273 = vsel %vm813, %v1252, 0.0
      %v1274 = vadd.f32 %v1272, %v1273
      %v1275 = vsel %vm813, %v1253, 0.0
      %v1276 = vadd.f32 %v1274, %v1275
      %v1277 = vsel %vm813, %v1254, 0.0
      %v1278 = vadd.f32 %v1276, %v1277
      %v1279 = vsel %vm813, %v1255, 0.0
      %v1280 = vadd.f32 %v1278, %v1279
      %v1281 = vsel %vm813, %v1256, 0.0
      %v1282 = vadd.f32 %v1280, %v1281
      %v1283 = vsel %vm813, %v1257, 0.0
      %v1284 = vadd.f32 %v1282, %v1283
      %v1285 = vsel %vm813, %v1258, 0.0
      %v1286 = vadd.f32 %v1284, %v1285
      %v1287 = vsel %vm813, %v1259, 0.0
      %v1288 = vadd.f32 %v1286, %v1287
      %v1289 = vsel %vm813, %v1260, 0.0
      %v1290 = vadd.f32 %v1288, %v1289
      %v1291 = vsel %vm813, %v1261, 0.0
      %v1292 = vadd.f32 %v1290, %v1291
      %1293 = vadd.xlane.f32.xlu0 %v1292
      %v1294 = vpop.xlane.xlu0 %1293
      %v1295 = vrot.slane %v1294, 4
      %v1296 = vadd.f32 %v1294, %v1295
      %v1297 = vrot.slane %v1296, 2
      %v1298 = vadd.f32 %v1296, %v1297
      %v1299 = vrot.slane %v1298, 1
      %v1300 = vadd.f32 %v1298, %v1299
      %s1301 = vtos %v1300
      %v1302 = vld [vmem:[#allocation7] sm:$0x1]
      %vm1303 = vcmask 1040384
      %v1304 = vsel %vm1303, %v1302, 0.0
      %1305 = vadd.xlane.f32.xlu0 %v1304
      %v1306 = vpop.xlane.xlu0 %1305
      %v1307 = vrot.slane %v1306, 4
      %v1308 = vadd.f32 %v1306, %v1307
      %v1309 = vrot.slane %v1308, 2
      %v1310 = vadd.f32 %v1308, %v1309
      %v1311 = vrot.slane %v1310, 1
      %v1312 = vadd.f32 %v1310, %v1311
      %s1313 = vtos %v1312
      %s1314 = sadd.f32 %s1301, %s1313
      %s1315 = smul.f32 %s1314, 0.5
      %v1316 = vld [vmem:[#allocation8] sm:$0xff]
      %v1317 = vld [vmem:[#allocation8 + $0x8] sm:$0xff]
      %v1318 = vld [vmem:[#allocation8 + $0x10] sm:$0xff]
      %v1319 = vld [vmem:[#allocation8 + $0x18] sm:$0xff]
      %v1320 = vld [vmem:[#allocation8 + $0x20] sm:$0xff]
      %v1321 = vld [vmem:[#allocation8 + $0x28] sm:$0xff]
      %v1322 = vld [vmem:[#allocation8 + $0x30] sm:$0xff]
      %v1323 = vld [vmem:[#allocation8 + $0x38] sm:$0xff]
      %v1324 = vld [vmem:[#allocation8 + $0x40] sm:$0xff]
      %v1325 = vld [vmem:[#allocation8 + $0x48] sm:$0xff]
      %v1326 = vld [vmem:[#allocation8 + $0x50] sm:$0xff]
      %v1327 = vld [vmem:[#allocation8 + $0x58] sm:$0xff]
      %v1328 = vld [vmem:[#allocation8 + $0x60] sm:$0xff]
      %v1329 = vld [vmem:[#allocation8 + $0x68] sm:$0xff]
      %v1330 = vld [vmem:[#allocation8 + $0x70] sm:$0xff]
      %v1331 = vld [vmem:[#allocation8 + $0x78] sm:$0xff]
      %v1332 = vsel %vm813, %v1316, 0.0
      %v1333 = vsel %vm813, %v1317, 0.0
      %v1334 = vadd.f32 %v1332, %v1333
      %v1335 = vsel %vm813, %v1318, 0.0
      %v1336 = vadd.f32 %v1334, %v1335
      %v1337 = vsel %vm813, %v1319, 0.0
      %v1338 = vadd.f32 %v1336, %v1337
      %v1339 = vsel %vm813, %v1320, 0.0
      %v1340 = vadd.f32 %v1338, %v1339
      %v1341 = vsel %vm813, %v1321, 0.0
      %v1342 = vadd.f32 %v1340, %v1341
      %v1343 = vsel %vm813, %v1322, 0.0
      %v1344 = vadd.f32 %v1342, %v1343
      %v1345 = vsel %vm813, %v1323, 0.0
      %v1346 = vadd.f32 %v1344, %v1345
      %v1347 = vsel %vm813, %v1324, 0.0
      %v1348 = vadd.f32 %v1346, %v1347
      %v1349 = vsel %vm813, %v1325, 0.0
      %v1350 = vadd.f32 %v1348, %v1349
      %v1351 = vsel %vm813, %v1326, 0.0
      %v1352 = vadd.f32 %v1350, %v1351
      %v1353 = vsel %vm813, %v1327, 0.0
      %v1354 = vadd.f32 %v1352, %v1353
      %v1355 = vsel %vm813, %v1328, 0.0
      %v1356 = vadd.f32 %v1354, %v1355
      %v1357 = vsel %vm813, %v1329, 0.0
      %v1358 = vadd.f32 %v1356, %v1357
      %v1359 = vsel %vm813, %v1330, 0.0
      %v1360 = vadd.f32 %v1358, %v1359
      %v1361 = vsel %vm813, %v1331, 0.0
      %v1362 = vadd.f32 %v1360, %v1361
      %1363 = vadd.xlane.f32.xlu0 %v1362
      %v1364 = vpop.xlane.xlu0 %1363
      %v1365 = vrot.slane %v1364, 4
      %v1366 = vadd.f32 %v1364, %v1365
      %v1367 = vrot.slane %v1366, 2
      %v1368 = vadd.f32 %v1366, %v1367
      %v1369 = vrot.slane %v1368, 1
      %v1370 = vadd.f32 %v1368, %v1369
      %s1371 = vtos %v1370
      %s1372 = ssub.f32 %s1315, %s1371
      %v1373 = vrcp.pop 8.0
      %s1374 = vtos %v1373
      %s1375 = smul.f32 %s1372, %s1374
      %v1376 = vstv %s1375
      %v1377 = vadd.f32 %v1376, 0.0
      %1378 = vst [vmem:[#allocation9] sm:$0xff] %v1377
    $region37: #{tpu_custom_call.1} parent=1 // pred_fallthru
      _
    // Predicated region
    $region38: #{tpu_custom_call.1} parent=1 // pred_check
      _
    $region39: #{tpu_custom_call.1} parent=1 // pred_check_branch
      %1380 = sbr.rel (0) target = $region41
    $region40: #{tpu_custom_call.1} parent=1 // pred_region
      %s1382 = ssub.s32 128, 128
      %1383 = vsyncadd [#allocation10], %s1382
      %s1385 = sshll.u32 [#allocation9], 4
      %s1386 = int_to_ptr.vmem [resolvable:$true] %s1385
      %1388 = dma.vmem_to_hbm [thread:$0]  %s1386, 128, %s2, [#allocation10]
    $region41: #{tpu_custom_call.1} parent=1 // pred_fallthru
      _
    // Predicated region
    $region42: #{tpu_custom_call.1} parent=1 // pred_check
      _
    $region43: #{tpu_custom_call.1} parent=1 // pred_check_branch
      %1390 = sbr.rel (0) target = $region45
    $region44: #{tpu_custom_call.1} parent=1 // pred_region
      %1391 = dma.done [#allocation10], 128
    $region45: #{tpu_custom_call.1} parent=1 // pred_fallthru
      _
    %1392 = vsyncpa [#allocation10], 1

</llo_original>
